<compile_context>
chip_gen: v6e
topology: v6e:2x2x1
jax: 0.10.0
libtpu: 0.0.40
codegen_flags: <defaults>
</compile_context>

<pallas_src>
import jax
import jax.numpy as jnp
import numpy as np
from jax.experimental import pallas as pl
from jax.experimental.pallas import tpu as pltpu


# ----------------------------------------------------------------------------
# Fused Pallas kernel: all MagNetConv layers + concat + 1x1 conv + log_softmax
# ----------------------------------------------------------------------------

def _make_fused_magnet_kernel(num_layers):
    """Builds the fused forward kernel for a fixed number of MagNetConv layers.

    Positional refs:
      xr, xi        : (N, F0)                  real / imag input node features (f32)
      lr, li        : (N, N)                   real / imag rescaled magnetic
                                               Laplacian L_hat = L - I (bf16 or f32)
      per layer l:
        w_l         : ((K+1)*Fin_l, Fout_l)    flattened Chebyshev weights (f32)
        b_l         : (1, Fout_l)              bias (f32)
      wc            : (2*hidden, label_dim)    1x1-conv weight (f32)
      bc            : (1, label_dim)           1x1-conv bias (f32)
      out           : (N, label_dim)           log-probabilities
    """

    def kernel(*refs):
        xr_ref, xi_ref, lr_ref, li_ref = refs[0], refs[1], refs[2], refs[3]
        layer_refs = refs[4:4 + 2 * num_layers]
        wc_ref, bc_ref = refs[4 + 2 * num_layers], refs[5 + 2 * num_layers]
        o_ref = refs[6 + 2 * num_layers]

        lr = lr_ref[...]              # VMEM resident across every layer
        li = li_ref[...]
        mxu_dtype = lr.dtype          # bf16 (default) or f32

        def magnet_conv_layer(x, w_ref, b_ref):
            # x : (N, 2*Fin) = [x_real | x_imag] concatenated along lanes.
            fin = x.shape[-1] // 2
            kp1 = w_ref.shape[0] // fin     # K + 1

            # Shared Chebyshev recursion: propagate the concatenated signal
            # once per Laplacian part instead of four separate recursions.
            # MXU operands in mxu_dtype, carries / accumulation in f32.
            x_mx = x.astype(mxu_dtype)
            t_lr = [x]
            t_li = [x]
            if kp1 > 1:
                t_lr.append(jnp.dot(lr, x_mx, preferred_element_type=jnp.float32))
                t_li.append(jnp.dot(li, x_mx, preferred_element_type=jnp.float32))
            for _ in range(2, kp1):
                t_lr.append(2.0 * jnp.dot(lr, t_lr[-1].astype(mxu_dtype),
                                          preferred_element_type=jnp.float32)
                            - t_lr[-2])
                t_li.append(2.0 * jnp.dot(li, t_li[-1].astype(mxu_dtype),
                                          preferred_element_type=jnp.float32)
                            - t_li[-2])

            # out_real = sum_k (T_k(lr) x_r - T_k(li) x_i) @ W_k
            # out_imag = sum_k (T_k(li) x_r + T_k(lr) x_i) @ W_k
            # Fuse the (K+1) weight matmuls: concatenate the k-terms along the
            # contraction axis and hit the flattened weight once per output.
            d_real = jnp.concatenate(
                [t_lr[k][:, :fin] - t_li[k][:, fin:] for k in range(kp1)], axis=-1)
            d_imag = jnp.concatenate(
                [t_li[k][:, :fin] + t_lr[k][:, fin:] for k in range(kp1)], axis=-1)

            w = w_ref[...]                  # ((K+1)*Fin, Fout) f32
            b = b_ref[...]                  # (1, Fout)
            out_r = jnp.dot(d_real, w, preferred_element_type=jnp.float32) + b
            out_i = jnp.dot(d_imag, w, preferred_element_type=jnp.float32) + b
            # activation=False (module default) -> no complex_relu
            return jnp.concatenate([out_r, out_i], axis=-1)

        x = jnp.concatenate([xr_ref[...].astype(jnp.float32),
                             xi_ref[...].astype(jnp.float32)], axis=-1)
        for layer in range(num_layers):
            x = magnet_conv_layer(x, layer_refs[2 * layer], layer_refs[2 * layer + 1])

        # x already equals cat([real, imag], -1); dropout=False (module default).
        # 1x1 Conv1d == (N, 2H) @ (2H, C) + b, then log_softmax over classes.
        logits = (jnp.dot(x, wc_ref[...], preferred_element_type=jnp.float32)
                  + bc_ref[...])
        m = jnp.max(logits, axis=-1, keepdims=True)
        z = logits - m
        lse = jnp.log(jnp.sum(jnp.exp(z), axis=-1, keepdims=True))
        o_ref[...] = (z - lse).astype(o_ref.dtype)

    return kernel


def magnet_forward(real, imag, l_real, l_imag, params, l_dtype=jnp.bfloat16):
    """Fused MagNet forward; returns (num_nodes, label_dim) log-probabilities."""
    n = real.shape[0]
    label_dim = params["conv_w"].shape[-1]
    num_layers = len(params["chebs"])

    args = [real.astype(jnp.float32), imag.astype(jnp.float32),
            l_real.astype(l_dtype), l_imag.astype(l_dtype)]
    for (w, b) in params["chebs"]:
        kp1, fin, fout = w.shape
        args.append(w.reshape(kp1 * fin, fout).astype(jnp.float32))
        args.append(b.astype(jnp.float32))
    args.append(params["conv_w"].astype(jnp.float32))
    args.append(params["conv_b"].astype(jnp.float32))

    # Whole-problem-in-VMEM kernel: budget VMEM explicitly and cap below the
    # smallest physical VMEM (v7x: 64 MiB) so the same call is valid everywhere.
    arg_bytes = sum(int(a.size) * a.dtype.itemsize for a in args)
    vmem_limit = int(min(60 * 2**20, max(32 * 2**20, 6 * arg_bytes)))

    vmem_spec = pl.BlockSpec(memory_space=pltpu.MemorySpace.VMEM)
    return pl.pallas_call(
        _make_fused_magnet_kernel(num_layers),
        out_shape=jax.ShapeDtypeStruct((n, label_dim), jnp.float32),
        in_specs=[vmem_spec] * len(args),
        out_specs=vmem_spec,
        compiler_params=pltpu.CompilerParams(vmem_limit_bytes=vmem_limit),
    )(*args)


# ----------------------------------------------------------------------------
# Plain-JAX glue: dense rescaled magnetic Laplacian  (L_hat = (2/lmax) L - I)
# ----------------------------------------------------------------------------

def build_magnetic_laplacian(edge_index, edge_weight, num_nodes, q):
    src, dst = edge_index[0], edge_index[1]
    a = jnp.zeros((num_nodes, num_nodes), jnp.float32).at[src, dst].add(edge_weight)
    a = a * (1.0 - jnp.eye(num_nodes, dtype=jnp.float32))   # remove self loops
    a_sym = 0.5 * (a + a.T)
    theta = 2.0 * jnp.pi * q * (a - a.T)
    deg = jnp.sum(a_sym, axis=1)
    dinv = jnp.where(deg > 0, 1.0 / jnp.sqrt(jnp.where(deg > 0, deg, 1.0)), 0.0)
    norm = dinv[:, None] * a_sym * dinv[None, :]
    # sym normalization, lambda_max = 2  =>  L_hat = -D^{-1/2} A_s D^{-1/2} exp(i Theta)
    # (message passing aggregates along targets, which transposes the
    #  antisymmetric imaginary part -> sign flip on the sin term)
    l_real = -norm * jnp.cos(theta)
    l_imag = norm * jnp.sin(theta)
    return l_real, l_imag


# ----------------------------------------------------------------------------
# Pure-JAX reference (mirrors the PyTorch MagNetConv math) for sanity checks
# ----------------------------------------------------------------------------

def _cheb_sum_ref(lmat, x, w, l_dtype):
    lm = lmat.astype(l_dtype)

    def prop(v):
        return jnp.dot(lm, v.astype(l_dtype), preferred_element_type=jnp.float32)

    acc = jnp.dot(x, w[0], preferred_element_type=jnp.float32)
    if w.shape[0] > 1:
        t1 = prop(x)
        acc = acc + jnp.dot(t1, w[1], preferred_element_type=jnp.float32)
        tprev, tcur = x, t1
        for k in range(2, w.shape[0]):
            tnext = 2.0 * prop(tcur) - tprev
            acc = acc + jnp.dot(tnext, w[k], preferred_element_type=jnp.float32)
            tprev, tcur = tcur, tnext
    return acc


def magnet_forward_ref(real, imag, l_real, l_imag, params, l_dtype=jnp.float32):
    for (w, b) in params["chebs"]:
        rr = _cheb_sum_ref(l_real, real, w, l_dtype)
        ii = _cheb_sum_ref(l_imag, imag, w, l_dtype)
        ir = _cheb_sum_ref(l_imag, real, w, l_dtype)
        ri = _cheb_sum_ref(l_real, imag, w, l_dtype)
        real, imag = rr - ii + b, ir + ri + b
    x = jnp.concatenate([real, imag], axis=-1)
    logits = jnp.dot(x, params["conv_w"],
                     preferred_element_type=jnp.float32) + params["conv_b"]
    return jax.nn.log_softmax(logits, axis=-1)


# ----------------------------------------------------------------------------

if __name__ == "__main__":
    num_nodes = 32
    num_features = 16
    hidden = 8
    K = 2
    label_dim = 4
    num_layers = 2
    q = 0.25
    num_edges = 64

    key = jax.random.PRNGKey(0)
    ks = jax.random.split(key, 10)

    src = jax.random.randint(ks[0], (num_edges,), 0, num_nodes)
    dst = jax.random.randint(ks[1], (num_edges,), 0, num_nodes)
    edge_index = jnp.stack([src, dst], axis=0)
    edge_weight = jnp.ones((num_edges,), jnp.float32)

    real = jax.random.normal(ks[2], (num_nodes, num_features), jnp.float32)
    imag = jax.random.normal(ks[3], (num_nodes, num_features), jnp.float32)

    # Deterministic synthetic parameters (shapes match the nn.Module __init__)
    cheb_params = []
    fin = num_features
    for layer in range(num_layers):
        w = 0.2 * jax.random.normal(ks[4 + layer], (K + 1, fin, hidden), jnp.float32)
        b = 0.1 * jax.random.normal(ks[6 + layer], (1, hidden), jnp.float32)
        cheb_params.append((w, b))
        fin = hidden
    # Conv1d(2*hidden, label_dim, kernel_size=1): weight (C, 2H, 1) -> stored (2H, C)
    conv_w = 0.2 * jax.random.normal(ks[8], (2 * hidden, label_dim), jnp.float32)
    conv_b = 0.1 * jax.random.normal(ks[9], (1, label_dim), jnp.float32)
    params = {"chebs": cheb_params, "conv_w": conv_w, "conv_b": conv_b}

    l_real, l_imag = build_magnetic_laplacian(edge_index, edge_weight, num_nodes, q)

    # (1) Mixed-precision path (bf16 Laplacian on the MXU, f32 accumulation):
    #     the perf-review production configuration; checked against a
    #     numerically matched reference.
    out_bf16 = jax.block_until_ready(
        magnet_forward(real, imag, l_real, l_imag, params, l_dtype=jnp.bfloat16))
    ref_bf16 = jax.block_until_ready(
        magnet_forward_ref(real, imag, l_real, l_imag, params, l_dtype=jnp.bfloat16))

    # (2) Full float32 path: matches the PyTorch module's f32 numerics.
    out_f32 = jax.block_until_ready(
        magnet_forward(real, imag, l_real, l_imag, params, l_dtype=jnp.float32))
    ref_f32 = jax.block_until_ready(
        magnet_forward_ref(real, imag, l_real, l_imag, params, l_dtype=jnp.float32))

    for out, ref in ((out_bf16, ref_bf16), (out_f32, ref_f32)):
        assert out.shape == (num_nodes, label_dim)
        assert np.all(np.isfinite(np.asarray(out)))
        np.testing.assert_allclose(np.asarray(out), np.asarray(ref),
                                   rtol=2e-3, atol=2e-3)

    print("KERNEL_OK")
</pallas_src>

<mosaic_0001>
module attributes {stable_mosaic.version = 11 : i64} {
  func.func @kernel(%arg0: memref<32x16xf32, #tpu.memory_space<vmem>>, %arg1: memref<32x16xf32, #tpu.memory_space<vmem>>, %arg2: memref<32x32xbf16, #tpu.memory_space<vmem>>, %arg3: memref<32x32xbf16, #tpu.memory_space<vmem>>, %arg4: memref<48x8xf32, #tpu.memory_space<vmem>>, %arg5: memref<1x8xf32, #tpu.memory_space<vmem>>, %arg6: memref<24x8xf32, #tpu.memory_space<vmem>>, %arg7: memref<1x8xf32, #tpu.memory_space<vmem>>, %arg8: memref<16x4xf32, #tpu.memory_space<vmem>>, %arg9: memref<1x4xf32, #tpu.memory_space<vmem>>, %arg10: memref<32x4xf32, #tpu.memory_space<vmem>>) attributes {dimension_semantics = [], scalar_prefetch = 0 : i64, scratch_operands = 0 : i64, tpu.core_type = #tpu.core_type<tc>} {
    %c0 = arith.constant 0 : index
    %c0_0 = arith.constant 0 : index
    %0 = vector.load %arg2[%c0, %c0_0] : memref<32x32xbf16, #tpu.memory_space<vmem>>, vector<32x32xbf16>
    %c0_1 = arith.constant 0 : index
    %c0_2 = arith.constant 0 : index
    %1 = vector.load %arg3[%c0_1, %c0_2] : memref<32x32xbf16, #tpu.memory_space<vmem>>, vector<32x32xbf16>
    %c0_3 = arith.constant 0 : index
    %c0_4 = arith.constant 0 : index
    %2 = vector.load %arg0[%c0_3, %c0_4] : memref<32x16xf32, #tpu.memory_space<vmem>>, vector<32x16xf32>
    %c0_5 = arith.constant 0 : index
    %c0_6 = arith.constant 0 : index
    %3 = vector.load %arg1[%c0_5, %c0_6] : memref<32x16xf32, #tpu.memory_space<vmem>>, vector<32x16xf32>
    %4 = tpu.concatenate %2, %3 in 1 : vector<32x16xf32>, vector<32x16xf32> -> vector<32x32xf32>
    %5 = arith.truncf %4 : vector<32x32xf32> to vector<32x32xbf16>
    %cst = arith.constant dense<0.000000e+00> : vector<32x32xf32>
    %6 = tpu.matmul %0, %5, %cst {dimension_numbers = #tpu.dot_dimension_numbers<[1], [0], [0], [1], [0, 0, 1, 1], [], []>} : vector<32x32xbf16>, vector<32x32xbf16>, vector<32x32xf32> -> vector<32x32xf32>
    %cst_7 = arith.constant dense<0.000000e+00> : vector<32x32xf32>
    %7 = tpu.matmul %1, %5, %cst_7 {dimension_numbers = #tpu.dot_dimension_numbers<[1], [0], [0], [1], [0, 0, 1, 1], [], []>} : vector<32x32xbf16>, vector<32x32xbf16>, vector<32x32xf32> -> vector<32x32xf32>
    %8 = arith.truncf %6 : vector<32x32xf32> to vector<32x32xbf16>
    %cst_8 = arith.constant dense<0.000000e+00> : vector<32x32xf32>
    %9 = tpu.matmul %0, %8, %cst_8 {dimension_numbers = #tpu.dot_dimension_numbers<[1], [0], [0], [1], [0, 0, 1, 1], [], []>} : vector<32x32xbf16>, vector<32x32xbf16>, vector<32x32xf32> -> vector<32x32xf32>
    %cst_9 = arith.constant 2.000000e+00 : f32
    %10 = vector.broadcast %cst_9 : f32 to vector<32x32xf32>
    %11 = arith.mulf %10, %9 : vector<32x32xf32>
    %12 = arith.subf %11, %4 : vector<32x32xf32>
    %13 = arith.truncf %7 : vector<32x32xf32> to vector<32x32xbf16>
    %cst_10 = arith.constant dense<0.000000e+00> : vector<32x32xf32>
    %14 = tpu.matmul %1, %13, %cst_10 {dimension_numbers = #tpu.dot_dimension_numbers<[1], [0], [0], [1], [0, 0, 1, 1], [], []>} : vector<32x32xbf16>, vector<32x32xbf16>, vector<32x32xf32> -> vector<32x32xf32>
    %cst_11 = arith.constant 2.000000e+00 : f32
    %15 = vector.broadcast %cst_11 : f32 to vector<32x32xf32>
    %16 = arith.mulf %15, %14 : vector<32x32xf32>
    %17 = arith.subf %16, %4 : vector<32x32xf32>
    %18 = vector.extract_strided_slice %4 {offsets = [0, 0], sizes = [32, 16], strides = [1, 1]} : vector<32x32xf32> to vector<32x16xf32>
    %19 = vector.extract_strided_slice %4 {offsets = [0, 16], sizes = [32, 16], strides = [1, 1]} : vector<32x32xf32> to vector<32x16xf32>
    %20 = arith.subf %18, %19 : vector<32x16xf32>
    %21 = vector.extract_strided_slice %6 {offsets = [0, 0], sizes = [32, 16], strides = [1, 1]} : vector<32x32xf32> to vector<32x16xf32>
    %22 = vector.extract_strided_slice %7 {offsets = [0, 16], sizes = [32, 16], strides = [1, 1]} : vector<32x32xf32> to vector<32x16xf32>
    %23 = arith.subf %21, %22 : vector<32x16xf32>
    %24 = vector.extract_strided_slice %12 {offsets = [0, 0], sizes = [32, 16], strides = [1, 1]} : vector<32x32xf32> to vector<32x16xf32>
    %25 = vector.extract_strided_slice %17 {offsets = [0, 16], sizes = [32, 16], strides = [1, 1]} : vector<32x32xf32> to vector<32x16xf32>
    %26 = arith.subf %24, %25 : vector<32x16xf32>
    %27 = tpu.concatenate %20, %23, %26 in 1 : vector<32x16xf32>, vector<32x16xf32>, vector<32x16xf32> -> vector<32x48xf32>
    %28 = vector.extract_strided_slice %4 {offsets = [0, 0], sizes = [32, 16], strides = [1, 1]} : vector<32x32xf32> to vector<32x16xf32>
    %29 = vector.extract_strided_slice %4 {offsets = [0, 16], sizes = [32, 16], strides = [1, 1]} : vector<32x32xf32> to vector<32x16xf32>
    %30 = arith.addf %28, %29 : vector<32x16xf32>
    %31 = vector.extract_strided_slice %7 {offsets = [0, 0], sizes = [32, 16], strides = [1, 1]} : vector<32x32xf32> to vector<32x16xf32>
    %32 = vector.extract_strided_slice %6 {offsets = [0, 16], sizes = [32, 16], strides = [1, 1]} : vector<32x32xf32> to vector<32x16xf32>
    %33 = arith.addf %31, %32 : vector<32x16xf32>
    %34 = vector.extract_strided_slice %17 {offsets = [0, 0], sizes = [32, 16], strides = [1, 1]} : vector<32x32xf32> to vector<32x16xf32>
    %35 = vector.extract_strided_slice %12 {offsets = [0, 16], sizes = [32, 16], strides = [1, 1]} : vector<32x32xf32> to vector<32x16xf32>
    %36 = arith.addf %34, %35 : vector<32x16xf32>
    %37 = tpu.concatenate %30, %33, %36 in 1 : vector<32x16xf32>, vector<32x16xf32>, vector<32x16xf32> -> vector<32x48xf32>
    %c0_12 = arith.constant 0 : index
    %c0_13 = arith.constant 0 : index
    %38 = vector.load %arg4[%c0_12, %c0_13] : memref<48x8xf32, #tpu.memory_space<vmem>>, vector<48x8xf32>
    %c0_14 = arith.constant 0 : index
    %c0_15 = arith.constant 0 : index
    %39 = vector.load %arg5[%c0_14, %c0_15] : memref<1x8xf32, #tpu.memory_space<vmem>>, vector<1x8xf32>
    %cst_16 = arith.constant dense<0.000000e+00> : vector<32x8xf32>
    %40 = tpu.matmul %27, %38, %cst_16 {dimension_numbers = #tpu.dot_dimension_numbers<[1], [0], [0], [1], [0, 0, 1, 1], [], []>} : vector<32x48xf32>, vector<48x8xf32>, vector<32x8xf32> -> vector<32x8xf32>
    %41 = vector.broadcast %39 : vector<1x8xf32> to vector<32x8xf32>
    %42 = arith.addf %40, %41 : vector<32x8xf32>
    %cst_17 = arith.constant dense<0.000000e+00> : vector<32x8xf32>
    %43 = tpu.matmul %37, %38, %cst_17 {dimension_numbers = #tpu.dot_dimension_numbers<[1], [0], [0], [1], [0, 0, 1, 1], [], []>} : vector<32x48xf32>, vector<48x8xf32>, vector<32x8xf32> -> vector<32x8xf32>
    %44 = vector.broadcast %39 : vector<1x8xf32> to vector<32x8xf32>
    %45 = arith.addf %43, %44 : vector<32x8xf32>
    %46 = tpu.concatenate %42, %45 in 1 : vector<32x8xf32>, vector<32x8xf32> -> vector<32x16xf32>
    %47 = arith.truncf %46 : vector<32x16xf32> to vector<32x16xbf16>
    %cst_18 = arith.constant dense<0.000000e+00> : vector<32x16xf32>
    %48 = tpu.matmul %0, %47, %cst_18 {dimension_numbers = #tpu.dot_dimension_numbers<[1], [0], [0], [1], [0, 0, 1, 1], [], []>} : vector<32x32xbf16>, vector<32x16xbf16>, vector<32x16xf32> -> vector<32x16xf32>
    %cst_19 = arith.constant dense<0.000000e+00> : vector<32x16xf32>
    %49 = tpu.matmul %1, %47, %cst_19 {dimension_numbers = #tpu.dot_dimension_numbers<[1], [0], [0], [1], [0, 0, 1, 1], [], []>} : vector<32x32xbf16>, vector<32x16xbf16>, vector<32x16xf32> -> vector<32x16xf32>
    %50 = arith.truncf %48 : vector<32x16xf32> to vector<32x16xbf16>
    %cst_20 = arith.constant dense<0.000000e+00> : vector<32x16xf32>
    %51 = tpu.matmul %0, %50, %cst_20 {dimension_numbers = #tpu.dot_dimension_numbers<[1], [0], [0], [1], [0, 0, 1, 1], [], []>} : vector<32x32xbf16>, vector<32x16xbf16>, vector<32x16xf32> -> vector<32x16xf32>
    %cst_21 = arith.constant 2.000000e+00 : f32
    %52 = vector.broadcast %cst_21 : f32 to vector<32x16xf32>
    %53 = arith.mulf %52, %51 : vector<32x16xf32>
    %54 = arith.subf %53, %46 : vector<32x16xf32>
    %55 = arith.truncf %49 : vector<32x16xf32> to vector<32x16xbf16>
    %cst_22 = arith.constant dense<0.000000e+00> : vector<32x16xf32>
    %56 = tpu.matmul %1, %55, %cst_22 {dimension_numbers = #tpu.dot_dimension_numbers<[1], [0], [0], [1], [0, 0, 1, 1], [], []>} : vector<32x32xbf16>, vector<32x16xbf16>, vector<32x16xf32> -> vector<32x16xf32>
    %cst_23 = arith.constant 2.000000e+00 : f32
    %57 = vector.broadcast %cst_23 : f32 to vector<32x16xf32>
    %58 = arith.mulf %57, %56 : vector<32x16xf32>
    %59 = arith.subf %58, %46 : vector<32x16xf32>
    %60 = vector.extract_strided_slice %46 {offsets = [0, 0], sizes = [32, 8], strides = [1, 1]} : vector<32x16xf32> to vector<32x8xf32>
    %61 = vector.extract_strided_slice %46 {offsets = [0, 8], sizes = [32, 8], strides = [1, 1]} : vector<32x16xf32> to vector<32x8xf32>
    %62 = arith.subf %60, %61 : vector<32x8xf32>
    %63 = vector.extract_strided_slice %48 {offsets = [0, 0], sizes = [32, 8], strides = [1, 1]} : vector<32x16xf32> to vector<32x8xf32>
    %64 = vector.extract_strided_slice %49 {offsets = [0, 8], sizes = [32, 8], strides = [1, 1]} : vector<32x16xf32> to vector<32x8xf32>
    %65 = arith.subf %63, %64 : vector<32x8xf32>
    %66 = vector.extract_strided_slice %54 {offsets = [0, 0], sizes = [32, 8], strides = [1, 1]} : vector<32x16xf32> to vector<32x8xf32>
    %67 = vector.extract_strided_slice %59 {offsets = [0, 8], sizes = [32, 8], strides = [1, 1]} : vector<32x16xf32> to vector<32x8xf32>
    %68 = arith.subf %66, %67 : vector<32x8xf32>
    %69 = tpu.concatenate %62, %65, %68 in 1 : vector<32x8xf32>, vector<32x8xf32>, vector<32x8xf32> -> vector<32x24xf32>
    %70 = vector.extract_strided_slice %46 {offsets = [0, 0], sizes = [32, 8], strides = [1, 1]} : vector<32x16xf32> to vector<32x8xf32>
    %71 = vector.extract_strided_slice %46 {offsets = [0, 8], sizes = [32, 8], strides = [1, 1]} : vector<32x16xf32> to vector<32x8xf32>
    %72 = arith.addf %70, %71 : vector<32x8xf32>
    %73 = vector.extract_strided_slice %49 {offsets = [0, 0], sizes = [32, 8], strides = [1, 1]} : vector<32x16xf32> to vector<32x8xf32>
    %74 = vector.extract_strided_slice %48 {offsets = [0, 8], sizes = [32, 8], strides = [1, 1]} : vector<32x16xf32> to vector<32x8xf32>
    %75 = arith.addf %73, %74 : vector<32x8xf32>
    %76 = vector.extract_strided_slice %59 {offsets = [0, 0], sizes = [32, 8], strides = [1, 1]} : vector<32x16xf32> to vector<32x8xf32>
    %77 = vector.extract_strided_slice %54 {offsets = [0, 8], sizes = [32, 8], strides = [1, 1]} : vector<32x16xf32> to vector<32x8xf32>
    %78 = arith.addf %76, %77 : vector<32x8xf32>
    %79 = tpu.concatenate %72, %75, %78 in 1 : vector<32x8xf32>, vector<32x8xf32>, vector<32x8xf32> -> vector<32x24xf32>
    %c0_24 = arith.constant 0 : index
    %c0_25 = arith.constant 0 : index
    %80 = vector.load %arg6[%c0_24, %c0_25] : memref<24x8xf32, #tpu.memory_space<vmem>>, vector<24x8xf32>
    %c0_26 = arith.constant 0 : index
    %c0_27 = arith.constant 0 : index
    %81 = vector.load %arg7[%c0_26, %c0_27] : memref<1x8xf32, #tpu.memory_space<vmem>>, vector<1x8xf32>
    %cst_28 = arith.constant dense<0.000000e+00> : vector<32x8xf32>
    %82 = tpu.matmul %69, %80, %cst_28 {dimension_numbers = #tpu.dot_dimension_numbers<[1], [0], [0], [1], [0, 0, 1, 1], [], []>} : vector<32x24xf32>, vector<24x8xf32>, vector<32x8xf32> -> vector<32x8xf32>
    %83 = vector.broadcast %81 : vector<1x8xf32> to vector<32x8xf32>
    %84 = arith.addf %82, %83 : vector<32x8xf32>
    %cst_29 = arith.constant dense<0.000000e+00> : vector<32x8xf32>
    %85 = tpu.matmul %79, %80, %cst_29 {dimension_numbers = #tpu.dot_dimension_numbers<[1], [0], [0], [1], [0, 0, 1, 1], [], []>} : vector<32x24xf32>, vector<24x8xf32>, vector<32x8xf32> -> vector<32x8xf32>
    %86 = vector.broadcast %81 : vector<1x8xf32> to vector<32x8xf32>
    %87 = arith.addf %85, %86 : vector<32x8xf32>
    %88 = tpu.concatenate %84, %87 in 1 : vector<32x8xf32>, vector<32x8xf32> -> vector<32x16xf32>
    %c0_30 = arith.constant 0 : index
    %c0_31 = arith.constant 0 : index
    %89 = vector.load %arg8[%c0_30, %c0_31] : memref<16x4xf32, #tpu.memory_space<vmem>>, vector<16x4xf32>
    %cst_32 = arith.constant dense<0.000000e+00> : vector<32x4xf32>
    %90 = tpu.matmul %88, %89, %cst_32 {dimension_numbers = #tpu.dot_dimension_numbers<[1], [0], [0], [1], [0, 0, 1, 1], [], []>} : vector<32x16xf32>, vector<16x4xf32>, vector<32x4xf32> -> vector<32x4xf32>
    %c0_33 = arith.constant 0 : index
    %c0_34 = arith.constant 0 : index
    %91 = vector.load %arg9[%c0_33, %c0_34] : memref<1x4xf32, #tpu.memory_space<vmem>>, vector<1x4xf32>
    %92 = vector.broadcast %91 : vector<1x4xf32> to vector<32x4xf32>
    %93 = arith.addf %90, %92 : vector<32x4xf32>
    %cst_35 = arith.constant dense<0xFF800000> : vector<32xf32>
    %94 = vector.multi_reduction <maximumf>, %93, %cst_35 [1] : vector<32x4xf32> to vector<32xf32>
    %95 = vector.shape_cast %94 : vector<32xf32> to vector<32x1xf32>
    %96 = vector.broadcast %95 : vector<32x1xf32> to vector<32x4xf32>
    %97 = arith.subf %93, %96 : vector<32x4xf32>
    %98 = math.exp %97 : vector<32x4xf32>
    %cst_36 = arith.constant dense<0.000000e+00> : vector<32xf32>
    %99 = vector.multi_reduction <add>, %98, %cst_36 [1] : vector<32x4xf32> to vector<32xf32>
    %100 = vector.shape_cast %99 : vector<32xf32> to vector<32x1xf32>
    %101 = math.log %100 : vector<32x1xf32>
    %102 = vector.broadcast %101 : vector<32x1xf32> to vector<32x4xf32>
    %103 = arith.subf %97, %102 : vector<32x4xf32>
    %c0_37 = arith.constant 0 : index
    %c0_38 = arith.constant 0 : index
    %104 = vector.load %arg10[%c0_37, %c0_38] : memref<32x4xf32, #tpu.memory_space<vmem>>, vector<32x4xf32>
    tpu.vector_store %arg10[%c0_37, %c0_38], %103 {strides = array<i32>} : memref<32x4xf32, #tpu.memory_space<vmem>>, vector<32x4xf32>,
    return
  }
}

</mosaic_0001>

<llo_original>
// kernel: tpu_custom_call.1
$region0: #{tpu_custom_call.1}
  #allocation0 [shape = 'u32[]', space=smem, size = 0x4, offset = 0x4, fixed_abs, tag = 'smem constant byte address 0x4 - core index']
  #allocation1 [shape = 'u32[144,128]{1,0:T(1,128)}', space=vmem, size = 0x12000, scoped, tag = 'internal scratch']
  %s0 = inlined_call_operand.vmem [shape: f32[32,16], index: 0, kind: input, shape index: {}]
  %s1 = inlined_call_operand.vmem [shape: f32[32,16], index: 1, kind: input, shape index: {}]
  %s2 = inlined_call_operand.vmem [shape: bf16[32,32], index: 2, kind: input, shape index: {}]
  %s3 = inlined_call_operand.vmem [shape: bf16[32,32], index: 3, kind: input, shape index: {}]
  %s4 = inlined_call_operand.vmem [shape: f32[48,8], index: 4, kind: input, shape index: {}]
  %s5 = inlined_call_operand.vmem [shape: f32[1,8], index: 5, kind: input, shape index: {}]
  %s6 = inlined_call_operand.vmem [shape: f32[24,8], index: 6, kind: input, shape index: {}]
  %s7 = inlined_call_operand.vmem [shape: f32[1,8], index: 7, kind: input, shape index: {}]
  %s8 = inlined_call_operand.vmem [shape: f32[16,4], index: 8, kind: input, shape index: {}]
  %s9 = inlined_call_operand.vmem [shape: f32[1,4], index: 9, kind: input, shape index: {}]
  %s10 = inlined_call_operand.vmem [shape: f32[32,4], index: 10, kind: output, shape index: {}]
  %s11 = sld [smem:[#allocation0]]
  $region50: #{tpu_custom_call.1} parent=0
    _
  %s13 = ssub.s32 1, %s11
  %s14 = scalar_select 0, %s13, %s11
  // Predicated region
  $region2: #{tpu_custom_call.1} parent=0 // pred_check
    _
  $region3: #{tpu_custom_call.1} parent=0 // pred_check_branch
    %16 = sbr.rel (0) target = $region5
  $region4: #{tpu_custom_call.1} parent=0 // pred_region
    _
  $region5: #{tpu_custom_call.1} parent=0 // pred_fallthru
    _
  // Predicated region
  $region6: #{tpu_custom_call.1} parent=0 // pred_check
    _
  $region7: #{tpu_custom_call.1} parent=0 // pred_check_branch
    %18 = sbr.rel (0) target = $region9
  $region8: #{tpu_custom_call.1} parent=0 // pred_region
    _
  $region9: #{tpu_custom_call.1} parent=0 // pred_fallthru
    _
  // Predicated region
  $region10: #{tpu_custom_call.1} parent=0 // pred_check
    _
  $region11: #{tpu_custom_call.1} parent=0 // pred_check_branch
    %20 = sbr.rel (0) target = $region13
  $region12: #{tpu_custom_call.1} parent=0 // pred_region
    _
  $region13: #{tpu_custom_call.1} parent=0 // pred_fallthru
    _
  // Predicated region
  $region14: #{tpu_custom_call.1} parent=0 // pred_check
    _
  $region15: #{tpu_custom_call.1} parent=0 // pred_check_branch
    %22 = sbr.rel (0) target = $region17
  $region16: #{tpu_custom_call.1} parent=0 // pred_region
    _
  $region17: #{tpu_custom_call.1} parent=0 // pred_fallthru
    _
  // Predicated region
  $region18: #{tpu_custom_call.1} parent=0 // pred_check
    _
  $region19: #{tpu_custom_call.1} parent=0 // pred_check_branch
    %24 = sbr.rel (0) target = $region21
  $region20: #{tpu_custom_call.1} parent=0 // pred_region
    _
  $region21: #{tpu_custom_call.1} parent=0 // pred_fallthru
    _
  // Predicated region
  $region22: #{tpu_custom_call.1} parent=0 // pred_check
    _
  $region23: #{tpu_custom_call.1} parent=0 // pred_check_branch
    %26 = sbr.rel (0) target = $region25
  $region24: #{tpu_custom_call.1} parent=0 // pred_region
    _
  $region25: #{tpu_custom_call.1} parent=0 // pred_fallthru
    _
  // Predicated region
  $region26: #{tpu_custom_call.1} parent=0 // pred_check
    _
  $region27: #{tpu_custom_call.1} parent=0 // pred_check_branch
    %28 = sbr.rel (0) target = $region29
  $region28: #{tpu_custom_call.1} parent=0 // pred_region
    _
  $region29: #{tpu_custom_call.1} parent=0 // pred_fallthru
    _
  // Predicated region
  $region30: #{tpu_custom_call.1} parent=0 // pred_check
    _
  $region31: #{tpu_custom_call.1} parent=0 // pred_check_branch
    %30 = sbr.rel (0) target = $region33
  $region32: #{tpu_custom_call.1} parent=0 // pred_region
    _
  $region33: #{tpu_custom_call.1} parent=0 // pred_fallthru
    _
  // Predicated region
  $region34: #{tpu_custom_call.1} parent=0 // pred_check
    _
  $region35: #{tpu_custom_call.1} parent=0 // pred_check_branch
    %32 = sbr.rel (0) target = $region37
  $region36: #{tpu_custom_call.1} parent=0 // pred_region
    _
  $region37: #{tpu_custom_call.1} parent=0 // pred_fallthru
    _
  // Predicated region
  $region38: #{tpu_custom_call.1} parent=0 // pred_check
    _
  $region39: #{tpu_custom_call.1} parent=0 // pred_check_branch
    %34 = sbr.rel (0) target = $region41
  $region40: #{tpu_custom_call.1} parent=0 // pred_region
    _
  $region41: #{tpu_custom_call.1} parent=0 // pred_fallthru
    _
  %v36 = vld [vmem:[%s2] sm:$0xf]
  %v37 = vld [vmem:[%s2 + $0x4] sm:$0xf]
  %v38 = vld [vmem:[%s2 + $0x8] sm:$0xf]
  %v39 = vld [vmem:[%s2 + $0xc] sm:$0xf]
  %v40 = vld [vmem:[%s3] sm:$0xf]
  %v41 = vld [vmem:[%s3 + $0x4] sm:$0xf]
  %v42 = vld [vmem:[%s3 + $0x8] sm:$0xf]
  %v43 = vld [vmem:[%s3 + $0xc] sm:$0xf]
  %v44 = vld [vmem:[%s0] sm:$0xff]
  %v45 = vld [vmem:[%s0 + $0x8] sm:$0xff]
  %v46 = vld [vmem:[%s0 + $0x10] sm:$0xff]
  %v47 = vld [vmem:[%s0 + $0x18] sm:$0xff]
  %v48 = vld [vmem:[%s1] sm:$0xff]
  %v49 = vld [vmem:[%s1 + $0x8] sm:$0xff]
  %v50 = vld [vmem:[%s1 + $0x10] sm:$0xff]
  %v51 = vld [vmem:[%s1 + $0x18] sm:$0xff]
  %56 = vrot.lane.b32.xlu0 %v48, 16
  %v57 = vpop.permute.xlu0 %56
  %58 = vrot.lane.b32.xlu0 %v49, 16
  %v59 = vpop.permute.xlu0 %58
  %60 = vrot.lane.b32.xlu0 %v50, 16
  %v61 = vpop.permute.xlu0 %60
  %62 = vrot.lane.b32.xlu0 %v51, 16
  %v63 = vpop.permute.xlu0 %62
  %vm68 = vcmask 130048
  %v69 = vsel %vm68, %v44, %v57
  %v70 = vsel %vm68, %v45, %v59
  %v71 = vsel %vm68, %v46, %v61
  %v72 = vsel %vm68, %v47, %v63
  %v73 = vpack.c.bf16 %v70, %v69
  %v74 = vpack.c.bf16 %v72, %v71
  %v79 = vunpack.c.l.b16 %v36
  %v80 = vunpack.c.l.b16 %v37
  %v81 = vunpack.c.l.b16 %v38
  %v82 = vunpack.c.l.b16 %v39
  %v83 = vpack.c.b16 %v80, %v79
  %v84 = vpack.c.b16 %v82, %v81
  %vm85 = vcmask 261120
  %v87 = vsel %vm85, %v83, 0
  %v90 = vsel %vm85, %v84, 0
  %92 = vmatprep.subr.bf16.mxu0 0
  %93 = vmatpush1.bf16.msra.mxu0 0
  %94 = vmatprep.subr.bf16.mxu0 0
  %95 = vmatpush1.bf16.msra.mxu0 0
  %96 = vmatprep.subr.bf16.mxu0 0
  %97 = vmatpush1.bf16.msra.mxu0 0
  %98 = vmatprep.subr.bf16.mxu0 0
  %99 = vmatpush1.bf16.msra.mxu0 0
  %100 = vmatprep.subr.bf16.mxu0 0
  %101 = vmatpush1.bf16.msra.mxu0 0
  %102 = vmatprep.subr.bf16.mxu0 0
  %103 = vmatpush1.bf16.msra.mxu0 0
  %104 = vmatprep.subr.bf16.mxu0 0
  %105 = vmatpush1.bf16.msra.mxu0 %v74
  %106 = vmatprep.subr.bf16.mxu0 0
  %107 = vmatpush1.bf16.msra.mxu0 %v73
  %108 = vmatprep.subr.bf16.mxu0 0
  %109 = vmatpush2.bf16.msra.mxu0 0
  %110 = vmatprep.subr.bf16.mxu0 0
  %111 = vmatpush2.bf16.msra.mxu0 0
  %112 = vmatprep.subr.bf16.mxu0 0
  %113 = vmatpush2.bf16.msra.mxu0 0
  %114 = vmatprep.subr.bf16.mxu0 0
  %115 = vmatpush2.bf16.msra.mxu0 0
  %116 = vmatprep.subr.bf16.mxu0 0
  %117 = vmatpush2.bf16.msra.mxu0 0
  %118 = vmatprep.subr.bf16.mxu0 0
  %119 = vmatpush2.bf16.msra.mxu0 0
  %120 = vmatprep.subr.bf16.mxu0 0
  %121 = vmatpush2.bf16.msra.mxu0 0
  %122 = vmatprep.subr.bf16.mxu0 0
  %123 = vmatpush2.bf16.msra.mxu0 0
  %124 = vmatprep.mubr.bf16.mxu0 0
  %125 = vmatmul.mubr.bf16.gmra.mxu0 %v87
  %v126 = vpop.f32.mrf.mxu0
  %v127 = vadd.f32 0.0, %v126
  %v128 = vpop.f32.mrf.mxu0
  %v129 = vpop.f32.mrf.mxu0
  %v130 = vadd.f32 0.0, %v129
  %v131 = vpop.f32.mrf.mxu0
  %132 = vmatprep.mubr.bf16.mxu0 0
  %133 = vmatmul.mubr.bf16.gmra.mxu0 %v90
  %v134 = vpop.f32.mrf.mxu0
  %v135 = vadd.f32 0.0, %v134
  %v136 = vpop.f32.mrf.mxu0
  %v137 = vpop.f32.mrf.mxu0
  %v138 = vadd.f32 0.0, %v137
  %v139 = vpop.f32.mrf.mxu0
  %140 = vdwg.mxu0
  %v145 = vunpack.c.l.b16 %v40
  %v146 = vunpack.c.l.b16 %v41
  %v147 = vunpack.c.l.b16 %v42
  %v148 = vunpack.c.l.b16 %v43
  %v149 = vpack.c.b16 %v146, %v145
  %v150 = vpack.c.b16 %v148, %v147
  %v152 = vsel %vm85, %v149, 0
  %v155 = vsel %vm85, %v150, 0
  %157 = vmatprep.subr.bf16.mxu0 0
  %158 = vmatpush1.bf16.msra.mxu0 0
  %159 = vmatprep.subr.bf16.mxu0 0
  %160 = vmatpush1.bf16.msra.mxu0 0
  %161 = vmatprep.subr.bf16.mxu0 0
  %162 = vmatpush1.bf16.msra.mxu0 0
  %163 = vmatprep.subr.bf16.mxu0 0
  %164 = vmatpush1.bf16.msra.mxu0 0
  %165 = vmatprep.subr.bf16.mxu0 0
  %166 = vmatpush1.bf16.msra.mxu0 0
  %167 = vmatprep.subr.bf16.mxu0 0
  %168 = vmatpush1.bf16.msra.mxu0 0
  %169 = vmatprep.subr.bf16.mxu0 0
  %170 = vmatpush1.bf16.msra.mxu0 %v74
  %171 = vmatprep.subr.bf16.mxu0 0
  %172 = vmatpush1.bf16.msra.mxu0 %v73
  %173 = vmatprep.subr.bf16.mxu0 0
  %174 = vmatpush2.bf16.msra.mxu0 0
  %175 = vmatprep.subr.bf16.mxu0 0
  %176 = vmatpush2.bf16.msra.mxu0 0
  %177 = vmatprep.subr.bf16.mxu0 0
  %178 = vmatpush2.bf16.msra.mxu0 0
  %179 = vmatprep.subr.bf16.mxu0 0
  %180 = vmatpush2.bf16.msra.mxu0 0
  %181 = vmatprep.subr.bf16.mxu0 0
  %182 = vmatpush2.bf16.msra.mxu0 0
  %183 = vmatprep.subr.bf16.mxu0 0
  %184 = vmatpush2.bf16.msra.mxu0 0
  %185 = vmatprep.subr.bf16.mxu0 0
  %186 = vmatpush2.bf16.msra.mxu0 0
  %187 = vmatprep.subr.bf16.mxu0 0
  %188 = vmatpush2.bf16.msra.mxu0 0
  %189 = vmatprep.mubr.bf16.mxu0 0
  %190 = vmatmul.mubr.bf16.gmra.mxu0 %v152
  %v191 = vpop.f32.mrf.mxu0
  %v192 = vadd.f32 0.0, %v191
  %v193 = vpop.f32.mrf.mxu0
  %v194 = vpop.f32.mrf.mxu0
  %v195 = vadd.f32 0.0, %v194
  %v196 = vpop.f32.mrf.mxu0
  %197 = vmatprep.mubr.bf16.mxu0 0
  %198 = vmatmul.mubr.bf16.gmra.mxu0 %v155
  %v199 = vpop.f32.mrf.mxu0
  %v200 = vadd.f32 0.0, %v199
  %v201 = vpop.f32.mrf.mxu0
  %v202 = vpop.f32.mrf.mxu0
  %v203 = vadd.f32 0.0, %v202
  %v204 = vpop.f32.mrf.mxu0
  %205 = vdwg.mxu0
  %v206 = vpack.c.bf16 %v130, %v127
  %v207 = vpack.c.bf16 %v138, %v135
  %208 = vmatprep.subr.bf16.mxu0 0
  %209 = vmatpush1.bf16.msra.mxu0 0
  %210 = vmatprep.subr.bf16.mxu0 0
  %211 = vmatpush1.bf16.msra.mxu0 0
  %212 = vmatprep.subr.bf16.mxu0 0
  %213 = vmatpush1.bf16.msra.mxu0 0
  %214 = vmatprep.subr.bf16.mxu0 0
  %215 = vmatpush1.bf16.msra.mxu0 0
  %216 = vmatprep.subr.bf16.mxu0 0
  %217 = vmatpush1.bf16.msra.mxu0 0
  %218 = vmatprep.subr.bf16.mxu0 0
  %219 = vmatpush1.bf16.msra.mxu0 0
  %220 = vmatprep.subr.bf16.mxu0 0
  %221 = vmatpush1.bf16.msra.mxu0 %v207
  %222 = vmatprep.subr.bf16.mxu0 0
  %223 = vmatpush1.bf16.msra.mxu0 %v206
  %224 = vmatprep.subr.bf16.mxu0 0
  %225 = vmatpush2.bf16.msra.mxu0 0
  %226 = vmatprep.subr.bf16.mxu0 0
  %227 = vmatpush2.bf16.msra.mxu0 0
  %228 = vmatprep.subr.bf16.mxu0 0
  %229 = vmatpush2.bf16.msra.mxu0 0
  %230 = vmatprep.subr.bf16.mxu0 0
  %231 = vmatpush2.bf16.msra.mxu0 0
  %232 = vmatprep.subr.bf16.mxu0 0
  %233 = vmatpush2.bf16.msra.mxu0 0
  %234 = vmatprep.subr.bf16.mxu0 0
  %235 = vmatpush2.bf16.msra.mxu0 0
  %236 = vmatprep.subr.bf16.mxu0 0
  %237 = vmatpush2.bf16.msra.mxu0 0
  %238 = vmatprep.subr.bf16.mxu0 0
  %239 = vmatpush2.bf16.msra.mxu0 0
  %240 = vmatprep.mubr.bf16.mxu0 0
  %241 = vmatmul.mubr.bf16.gmra.mxu0 %v87
  %v242 = vpop.f32.mrf.mxu0
  %v243 = vadd.f32 0.0, %v242
  %v244 = vpop.f32.mrf.mxu0
  %v245 = vpop.f32.mrf.mxu0
  %v246 = vadd.f32 0.0, %v245
  %v247 = vpop.f32.mrf.mxu0
  %248 = vmatprep.mubr.bf16.mxu0 0
  %249 = vmatmul.mubr.bf16.gmra.mxu0 %v90
  %v250 = vpop.f32.mrf.mxu0
  %v251 = vadd.f32 0.0, %v250
  %v252 = vpop.f32.mrf.mxu0
  %v253 = vpop.f32.mrf.mxu0
  %v254 = vadd.f32 0.0, %v253
  %v255 = vpop.f32.mrf.mxu0
  %256 = vdwg.mxu0
  %v257 = vmul.f32 %v243, 2.0
  %v258 = vmul.f32 %v246, 2.0
  %v259 = vmul.f32 %v251, 2.0
  %v260 = vmul.f32 %v254, 2.0
  %v261 = vsub.f32 %v257, %v69
  %v262 = vsub.f32 %v258, %v70
  %v263 = vsub.f32 %v259, %v71
  %v264 = vsub.f32 %v260, %v72
  %v265 = vpack.c.bf16 %v195, %v192
  %v266 = vpack.c.bf16 %v203, %v200
  %267 = vmatprep.subr.bf16.mxu0 0
  %268 = vmatpush1.bf16.msra.mxu0 0
  %269 = vmatprep.subr.bf16.mxu0 0
  %270 = vmatpush1.bf16.msra.mxu0 0
  %271 = vmatprep.subr.bf16.mxu0 0
  %272 = vmatpush1.bf16.msra.mxu0 0
  %273 = vmatprep.subr.bf16.mxu0 0
  %274 = vmatpush1.bf16.msra.mxu0 0
  %275 = vmatprep.subr.bf16.mxu0 0
  %276 = vmatpush1.bf16.msra.mxu0 0
  %277 = vmatprep.subr.bf16.mxu0 0
  %278 = vmatpush1.bf16.msra.mxu0 0
  %279 = vmatprep.subr.bf16.mxu0 0
  %280 = vmatpush1.bf16.msra.mxu0 %v266
  %281 = vmatprep.subr.bf16.mxu0 0
  %282 = vmatpush1.bf16.msra.mxu0 %v265
  %283 = vmatprep.subr.bf16.mxu0 0
  %284 = vmatpush2.bf16.msra.mxu0 0
  %285 = vmatprep.subr.bf16.mxu0 0
  %286 = vmatpush2.bf16.msra.mxu0 0
  %287 = vmatprep.subr.bf16.mxu0 0
  %288 = vmatpush2.bf16.msra.mxu0 0
  %289 = vmatprep.subr.bf16.mxu0 0
  %290 = vmatpush2.bf16.msra.mxu0 0
  %291 = vmatprep.subr.bf16.mxu0 0
  %292 = vmatpush2.bf16.msra.mxu0 0
  %293 = vmatprep.subr.bf16.mxu0 0
  %294 = vmatpush2.bf16.msra.mxu0 0
  %295 = vmatprep.subr.bf16.mxu0 0
  %296 = vmatpush2.bf16.msra.mxu0 0
  %297 = vmatprep.subr.bf16.mxu0 0
  %298 = vmatpush2.bf16.msra.mxu0 0
  %299 = vmatprep.mubr.bf16.mxu0 0
  %300 = vmatmul.mubr.bf16.gmra.mxu0 %v152
  %v301 = vpop.f32.mrf.mxu0
  %v302 = vadd.f32 0.0, %v301
  %v303 = vpop.f32.mrf.mxu0
  %v304 = vpop.f32.mrf.mxu0
  %v305 = vadd.f32 0.0, %v304
  %v306 = vpop.f32.mrf.mxu0
  %307 = vmatprep.mubr.bf16.mxu0 0
  %308 = vmatmul.mubr.bf16.gmra.mxu0 %v155
  %v309 = vpop.f32.mrf.mxu0
  %v310 = vadd.f32 0.0, %v309
  %v311 = vpop.f32.mrf.mxu0
  %v312 = vpop.f32.mrf.mxu0
  %v313 = vadd.f32 0.0, %v312
  %v314 = vpop.f32.mrf.mxu0
  %315 = vdwg.mxu0
  %v316 = vmul.f32 %v302, 2.0
  %v317 = vmul.f32 %v305, 2.0
  %v318 = vmul.f32 %v310, 2.0
  %v319 = vmul.f32 %v313, 2.0
  %v320 = vsub.f32 %v316, %v69
  %v321 = vsub.f32 %v317, %v70
  %v322 = vsub.f32 %v318, %v71
  %v323 = vsub.f32 %v319, %v72
  %328 = vrot.lane.b32.xlu0 %v69, 112
  %v329 = vpop.permute.xlu0 %328
  %330 = vrot.lane.b32.xlu0 %v70, 112
  %v331 = vpop.permute.xlu0 %330
  %332 = vrot.lane.b32.xlu0 %v71, 112
  %v333 = vpop.permute.xlu0 %332
  %334 = vrot.lane.b32.xlu0 %v72, 112
  %v335 = vpop.permute.xlu0 %334
  %v340 = vsub.f32 %v69, %v329
  %v341 = vsub.f32 %v70, %v331
  %v342 = vsub.f32 %v71, %v333
  %v343 = vsub.f32 %v72, %v335
  %348 = vrot.lane.b32.xlu0 %v192, 112
  %v349 = vpop.permute.xlu0 %348
  %350 = vrot.lane.b32.xlu0 %v195, 112
  %v351 = vpop.permute.xlu0 %350
  %352 = vrot.lane.b32.xlu0 %v200, 112
  %v353 = vpop.permute.xlu0 %352
  %354 = vrot.lane.b32.xlu0 %v203, 112
  %v355 = vpop.permute.xlu0 %354
  %v360 = vsub.f32 %v127, %v349
  %v361 = vsub.f32 %v130, %v351
  %v362 = vsub.f32 %v135, %v353
  %v363 = vsub.f32 %v138, %v355
  %368 = vrot.lane.b32.xlu0 %v320, 112
  %v369 = vpop.permute.xlu0 %368
  %370 = vrot.lane.b32.xlu0 %v321, 112
  %v371 = vpop.permute.xlu0 %370
  %372 = vrot.lane.b32.xlu0 %v322, 112
  %v373 = vpop.permute.xlu0 %372
  %374 = vrot.lane.b32.xlu0 %v323, 112
  %v375 = vpop.permute.xlu0 %374
  %v380 = vsub.f32 %v261, %v369
  %v381 = vsub.f32 %v262, %v371
  %v382 = vsub.f32 %v263, %v373
  %v383 = vsub.f32 %v264, %v375
  %388 = vrot.lane.b32.xlu0 %v360, 16
  %v389 = vpop.permute.xlu0 %388
  %390 = vrot.lane.b32.xlu0 %v361, 16
  %v391 = vpop.permute.xlu0 %390
  %392 = vrot.lane.b32.xlu0 %v362, 16
  %v393 = vpop.permute.xlu0 %392
  %394 = vrot.lane.b32.xlu0 %v363, 16
  %v395 = vpop.permute.xlu0 %394
  %404 = vrot.lane.b32.xlu0 %v380, 32
  %v405 = vpop.permute.xlu0 %404
  %406 = vrot.lane.b32.xlu0 %v381, 32
  %v407 = vpop.permute.xlu0 %406
  %408 = vrot.lane.b32.xlu0 %v382, 32
  %v409 = vpop.permute.xlu0 %408
  %410 = vrot.lane.b32.xlu0 %v383, 32
  %v411 = vpop.permute.xlu0 %410
  %v416 = vsel %vm68, %v340, %v389
  %v417 = vsel %vm68, %v341, %v391
  %v418 = vsel %vm68, %v342, %v393
  %v419 = vsel %vm68, %v343, %v395
  %v420 = vsel %vm85, %v416, %v405
  %v421 = vsel %vm85, %v417, %v407
  %v422 = vsel %vm85, %v418, %v409
  %v423 = vsel %vm85, %v419, %v411
  %v424 = vadd.f32 %v69, %v329
  %v425 = vadd.f32 %v70, %v331
  %v426 = vadd.f32 %v71, %v333
  %v427 = vadd.f32 %v72, %v335
  %432 = vrot.lane.b32.xlu0 %v127, 112
  %v433 = vpop.permute.xlu0 %432
  %434 = vrot.lane.b32.xlu0 %v130, 112
  %v435 = vpop.permute.xlu0 %434
  %436 = vrot.lane.b32.xlu0 %v135, 112
  %v437 = vpop.permute.xlu0 %436
  %438 = vrot.lane.b32.xlu0 %v138, 112
  %v439 = vpop.permute.xlu0 %438
  %v444 = vadd.f32 %v192, %v433
  %v445 = vadd.f32 %v195, %v435
  %v446 = vadd.f32 %v200, %v437
  %v447 = vadd.f32 %v203, %v439
  %452 = vrot.lane.b32.xlu0 %v261, 112
  %v453 = vpop.permute.xlu0 %452
  %454 = vrot.lane.b32.xlu0 %v262, 112
  %v455 = vpop.permute.xlu0 %454
  %456 = vrot.lane.b32.xlu0 %v263, 112
  %v457 = vpop.permute.xlu0 %456
  %458 = vrot.lane.b32.xlu0 %v264, 112
  %v459 = vpop.permute.xlu0 %458
  %v464 = vadd.f32 %v320, %v453
  %v465 = vadd.f32 %v321, %v455
  %v466 = vadd.f32 %v322, %v457
  %v467 = vadd.f32 %v323, %v459
  %472 = vrot.lane.b32.xlu0 %v444, 16
  %v473 = vpop.permute.xlu0 %472
  %474 = vrot.lane.b32.xlu0 %v445, 16
  %v475 = vpop.permute.xlu0 %474
  %476 = vrot.lane.b32.xlu0 %v446, 16
  %v477 = vpop.permute.xlu0 %476
  %478 = vrot.lane.b32.xlu0 %v447, 16
  %v479 = vpop.permute.xlu0 %478
  %488 = vrot.lane.b32.xlu0 %v464, 32
  %v489 = vpop.permute.xlu0 %488
  %490 = vrot.lane.b32.xlu0 %v465, 32
  %v491 = vpop.permute.xlu0 %490
  %492 = vrot.lane.b32.xlu0 %v466, 32
  %v493 = vpop.permute.xlu0 %492
  %494 = vrot.lane.b32.xlu0 %v467, 32
  %v495 = vpop.permute.xlu0 %494
  %v500 = vsel %vm68, %v424, %v473
  %v501 = vsel %vm68, %v425, %v475
  %v502 = vsel %vm68, %v426, %v477
  %v503 = vsel %vm68, %v427, %v479
  %v504 = vsel %vm85, %v500, %v489
  %v505 = vsel %vm85, %v501, %v491
  %v506 = vsel %vm85, %v502, %v493
  %v507 = vsel %vm85, %v503, %v495
  %v508 = vld [vmem:[%s4] sm:$0xff]
  %v509 = vld [vmem:[%s4 + $0x8] sm:$0xff]
  %v510 = vld [vmem:[%s4 + $0x10] sm:$0xff]
  %v511 = vld [vmem:[%s4 + $0x18] sm:$0xff]
  %v512 = vld [vmem:[%s4 + $0x20] sm:$0xff]
  %v513 = vld [vmem:[%s4 + $0x28] sm:$0xff]
  %v514 = vld [vmem:[%s5] sm:$0x1]
  %v516 = vlaneseq
  %v517 = vshrl.u32 %v516, 7
  %v518 = vsub.s32 0, %v517
  %v519 = vrot.slane %v514, %v518
  %vm521 = vcmask 392192
  %v523 = vsel %vm521, %v420, 0
  %v526 = vsel %vm521, %v421, 0
  %v529 = vsel %vm521, %v422, 0
  %v532 = vsel %vm521, %v423, 0
  %534 = vmatprep.subr.mxu0 0.0
  %535 = vmatpush1.msra.mxu0 0.0
  %536 = vmatprep.subr.mxu0 0.0
  %537 = vmatpush1.msra.mxu0 0.0
  %538 = vmatprep.subr.mxu0 0.0
  %539 = vmatpush1.msra.mxu0 0.0
  %540 = vmatprep.subr.mxu0 0.0
  %541 = vmatpush1.msra.mxu0 0.0
  %542 = vmatprep.subr.mxu0 0.0
  %543 = vmatpush1.msra.mxu0 0.0
  %544 = vmatprep.subr.mxu0 0.0
  %545 = vmatpush1.msra.mxu0 0.0
  %546 = vmatprep.subr.mxu0 0.0
  %547 = vmatpush1.msra.mxu0 0.0
  %548 = vmatprep.subr.mxu0 0.0
  %549 = vmatpush1.msra.mxu0 0.0
  %550 = vmatprep.subr.mxu0 0.0
  %551 = vmatpush1.msra.mxu0 0.0
  %552 = vmatprep.subr.mxu0 0.0
  %553 = vmatpush1.msra.mxu0 0.0
  %554 = vmatprep.subr.mxu0 0.0
  %555 = vmatpush1.msra.mxu0 %v513
  %556 = vmatprep.subr.mxu0 0.0
  %557 = vmatpush1.msra.mxu0 %v512
  %558 = vmatprep.subr.mxu0 0.0
  %559 = vmatpush1.msra.mxu0 %v511
  %560 = vmatprep.subr.mxu0 0.0
  %561 = vmatpush1.msra.mxu0 %v510
  %562 = vmatprep.subr.mxu0 0.0
  %563 = vmatpush1.msra.mxu0 %v509
  %564 = vmatprep.subr.mxu0 0.0
  %565 = vmatpush1.msra.mxu0 %v508
  %566 = vmatprep.subr.mxu0 0.0
  %567 = vmatpush2.msra.mxu0 0.0
  %568 = vmatprep.subr.mxu0 0.0
  %569 = vmatpush2.msra.mxu0 0.0
  %570 = vmatprep.subr.mxu0 0.0
  %571 = vmatpush2.msra.mxu0 0.0
  %572 = vmatprep.subr.mxu0 0.0
  %573 = vmatpush2.msra.mxu0 0.0
  %574 = vmatprep.subr.mxu0 0.0
  %575 = vmatpush2.msra.mxu0 0.0
  %576 = vmatprep.subr.mxu0 0.0
  %577 = vmatpush2.msra.mxu0 0.0
  %578 = vmatprep.subr.mxu0 0.0
  %579 = vmatpush2.msra.mxu0 0.0
  %580 = vmatprep.subr.mxu0 0.0
  %581 = vmatpush2.msra.mxu0 0.0
  %582 = vmatprep.subr.mxu0 0.0
  %583 = vmatpush2.msra.mxu0 0.0
  %584 = vmatprep.subr.mxu0 0.0
  %585 = vmatpush2.msra.mxu0 0.0
  %586 = vmatprep.subr.mxu0 0.0
  %587 = vmatpush2.msra.mxu0 0.0
  %588 = vmatprep.subr.mxu0 0.0
  %589 = vmatpush2.msra.mxu0 0.0
  %590 = vmatprep.subr.mxu0 0.0
  %591 = vmatpush2.msra.mxu0 0.0
  %592 = vmatprep.subr.mxu0 0.0
  %593 = vmatpush2.msra.mxu0 0.0
  %594 = vmatprep.subr.mxu0 0.0
  %595 = vmatpush2.msra.mxu0 0.0
  %596 = vmatprep.subr.mxu0 0.0
  %597 = vmatpush2.msra.mxu0 0.0
  %598 = vmatprep.mubr.f32.mxu0 0.0
  %599 = vmatmul.mubr.f32.gmra.mxu0 %v523
  %v600 = vpop.f32.mrf.mxu0
  %v601 = vadd.f32 %v519, %v600
  %v602 = vpop.f32.mrf.mxu0
  %603 = vmatprep.mubr.f32.mxu0 0.0
  %604 = vmatmul.mubr.f32.gmra.mxu0 %v526
  %v605 = vpop.f32.mrf.mxu0
  %v606 = vadd.f32 %v519, %v605
  %v607 = vpop.f32.mrf.mxu0
  %608 = vmatprep.mubr.f32.mxu0 0.0
  %609 = vmatmul.mubr.f32.gmra.mxu0 %v529
  %v610 = vpop.f32.mrf.mxu0
  %v611 = vadd.f32 %v519, %v610
  %v612 = vpop.f32.mrf.mxu0
  %613 = vmatprep.mubr.f32.mxu0 0.0
  %614 = vmatmul.mubr.f32.gmra.mxu0 %v532
  %v615 = vpop.f32.mrf.mxu0
  %v616 = vadd.f32 %v519, %v615
  %v617 = vpop.f32.mrf.mxu0
  %618 = vdwg.mxu0
  %v620 = vsel %vm521, %v504, 0
  %v623 = vsel %vm521, %v505, 0
  %v626 = vsel %vm521, %v506, 0
  %v629 = vsel %vm521, %v507, 0
  %631 = vmatprep.subr.mxu0 0.0
  %632 = vmatpush1.msra.mxu0 0.0
  %633 = vmatprep.subr.mxu0 0.0
  %634 = vmatpush1.msra.mxu0 0.0
  %635 = vmatprep.subr.mxu0 0.0
  %636 = vmatpush1.msra.mxu0 0.0
  %637 = vmatprep.subr.mxu0 0.0
  %638 = vmatpush1.msra.mxu0 0.0
  %639 = vmatprep.subr.mxu0 0.0
  %640 = vmatpush1.msra.mxu0 0.0
  %641 = vmatprep.subr.mxu0 0.0
  %642 = vmatpush1.msra.mxu0 0.0
  %643 = vmatprep.subr.mxu0 0.0
  %644 = vmatpush1.msra.mxu0 0.0
  %645 = vmatprep.subr.mxu0 0.0
  %646 = vmatpush1.msra.mxu0 0.0
  %647 = vmatprep.subr.mxu0 0.0
  %648 = vmatpush1.msra.mxu0 0.0
  %649 = vmatprep.subr.mxu0 0.0
  %650 = vmatpush1.msra.mxu0 0.0
  %651 = vmatprep.subr.mxu0 0.0
  %652 = vmatpush1.msra.mxu0 %v513
  %653 = vmatprep.subr.mxu0 0.0
  %654 = vmatpush1.msra.mxu0 %v512
  %655 = vmatprep.subr.mxu0 0.0
  %656 = vmatpush1.msra.mxu0 %v511
  %657 = vmatprep.subr.mxu0 0.0
  %658 = vmatpush1.msra.mxu0 %v510
  %659 = vmatprep.subr.mxu0 0.0
  %660 = vmatpush1.msra.mxu0 %v509
  %661 = vmatprep.subr.mxu0 0.0
  %662 = vmatpush1.msra.mxu0 %v508
  %663 = vmatprep.subr.mxu0 0.0
  %664 = vmatpush2.msra.mxu0 0.0
  %665 = vmatprep.subr.mxu0 0.0
  %666 = vmatpush2.msra.mxu0 0.0
  %667 = vmatprep.subr.mxu0 0.0
  %668 = vmatpush2.msra.mxu0 0.0
  %669 = vmatprep.subr.mxu0 0.0
  %670 = vmatpush2.msra.mxu0 0.0
  %671 = vmatprep.subr.mxu0 0.0
  %672 = vmatpush2.msra.mxu0 0.0
  %673 = vmatprep.subr.mxu0 0.0
  %674 = vmatpush2.msra.mxu0 0.0
  %675 = vmatprep.subr.mxu0 0.0
  %676 = vmatpush2.msra.mxu0 0.0
  %677 = vmatprep.subr.mxu0 0.0
  %678 = vmatpush2.msra.mxu0 0.0
  %679 = vmatprep.subr.mxu0 0.0
  %680 = vmatpush2.msra.mxu0 0.0
  %681 = vmatprep.subr.mxu0 0.0
  %682 = vmatpush2.msra.mxu0 0.0
  %683 = vmatprep.subr.mxu0 0.0
  %684 = vmatpush2.msra.mxu0 0.0
  %685 = vmatprep.subr.mxu0 0.0
  %686 = vmatpush2.msra.mxu0 0.0
  %687 = vmatprep.subr.mxu0 0.0
  %688 = vmatpush2.msra.mxu0 0.0
  %689 = vmatprep.subr.mxu0 0.0
  %690 = vmatpush2.msra.mxu0 0.0
  %691 = vmatprep.subr.mxu0 0.0
  %692 = vmatpush2.msra.mxu0 0.0
  %693 = vmatprep.subr.mxu0 0.0
  %694 = vmatpush2.msra.mxu0 0.0
  %695 = vmatprep.mubr.f32.mxu0 0.0
  %696 = vmatmul.mubr.f32.gmra.mxu0 %v620
  %v697 = vpop.f32.mrf.mxu0
  %v698 = vadd.f32 %v519, %v697
  %v699 = vpop.f32.mrf.mxu0
  %700 = vmatprep.mubr.f32.mxu0 0.0
  %701 = vmatmul.mubr.f32.gmra.mxu0 %v623
  %v702 = vpop.f32.mrf.mxu0
  %v703 = vadd.f32 %v519, %v702
  %v704 = vpop.f32.mrf.mxu0
  %705 = vmatprep.mubr.f32.mxu0 0.0
  %706 = vmatmul.mubr.f32.gmra.mxu0 %v626
  %v707 = vpop.f32.mrf.mxu0
  %v708 = vadd.f32 %v519, %v707
  %v709 = vpop.f32.mrf.mxu0
  %710 = vmatprep.mubr.f32.mxu0 0.0
  %711 = vmatmul.mubr.f32.gmra.mxu0 %v629
  %v712 = vpop.f32.mrf.mxu0
  %v713 = vadd.f32 %v519, %v712
  %v714 = vpop.f32.mrf.mxu0
  %715 = vdwg.mxu0
  %720 = vrot.lane.b32.xlu0 %v698, 8
  %v721 = vpop.permute.xlu0 %720
  %722 = vrot.lane.b32.xlu0 %v703, 8
  %v723 = vpop.permute.xlu0 %722
  %724 = vrot.lane.b32.xlu0 %v708, 8
  %v725 = vpop.permute.xlu0 %724
  %726 = vrot.lane.b32.xlu0 %v713, 8
  %v727 = vpop.permute.xlu0 %726
  %vm732 = vcmask 64512
  %v733 = vsel %vm732, %v601, %v721
  %v734 = vsel %vm732, %v606, %v723
  %v735 = vsel %vm732, %v611, %v725
  %v736 = vsel %vm732, %v616, %v727
  %v737 = vpack.c.bf16 %v734, %v733
  %v738 = vpack.c.bf16 %v736, %v735
  %739 = vmatprep.subr.bf16.mxu0 0
  %740 = vmatpush1.bf16.msra.mxu0 0
  %741 = vmatprep.subr.bf16.mxu0 0
  %742 = vmatpush1.bf16.msra.mxu0 0
  %743 = vmatprep.subr.bf16.mxu0 0
  %744 = vmatpush1.bf16.msra.mxu0 0
  %745 = vmatprep.subr.bf16.mxu0 0
  %746 = vmatpush1.bf16.msra.mxu0 0
  %747 = vmatprep.subr.bf16.mxu0 0
  %748 = vmatpush1.bf16.msra.mxu0 0
  %749 = vmatprep.subr.bf16.mxu0 0
  %750 = vmatpush1.bf16.msra.mxu0 0
  %751 = vmatprep.subr.bf16.mxu0 0
  %752 = vmatpush1.bf16.msra.mxu0 %v738
  %753 = vmatprep.subr.bf16.mxu0 0
  %754 = vmatpush1.bf16.msra.mxu0 %v737
  %755 = vmatprep.subr.bf16.mxu0 0
  %756 = vmatpush2.bf16.msra.mxu0 0
  %757 = vmatprep.subr.bf16.mxu0 0
  %758 = vmatpush2.bf16.msra.mxu0 0
  %759 = vmatprep.subr.bf16.mxu0 0
  %760 = vmatpush2.bf16.msra.mxu0 0
  %761 = vmatprep.subr.bf16.mxu0 0
  %762 = vmatpush2.bf16.msra.mxu0 0
  %763 = vmatprep.subr.bf16.mxu0 0
  %764 = vmatpush2.bf16.msra.mxu0 0
  %765 = vmatprep.subr.bf16.mxu0 0
  %766 = vmatpush2.bf16.msra.mxu0 0
  %767 = vmatprep.subr.bf16.mxu0 0
  %768 = vmatpush2.bf16.msra.mxu0 0
  %769 = vmatprep.subr.bf16.mxu0 0
  %770 = vmatpush2.bf16.msra.mxu0 0
  %771 = vmatprep.mubr.bf16.mxu0 0
  %772 = vmatmul.mubr.bf16.gmra.mxu0 %v87
  %v773 = vpop.f32.mrf.mxu0
  %v774 = vadd.f32 0.0, %v773
  %v775 = vpop.f32.mrf.mxu0
  %v776 = vpop.f32.mrf.mxu0
  %v777 = vadd.f32 0.0, %v776
  %v778 = vpop.f32.mrf.mxu0
  %779 = vmatprep.mubr.bf16.mxu0 0
  %780 = vmatmul.mubr.bf16.gmra.mxu0 %v90
  %v781 = vpop.f32.mrf.mxu0
  %v782 = vadd.f32 0.0, %v781
  %v783 = vpop.f32.mrf.mxu0
  %v784 = vpop.f32.mrf.mxu0
  %v785 = vadd.f32 0.0, %v784
  %v786 = vpop.f32.mrf.mxu0
  %787 = vdwg.mxu0
  %788 = vmatprep.subr.bf16.mxu0 0
  %789 = vmatpush1.bf16.msra.mxu0 0
  %790 = vmatprep.subr.bf16.mxu0 0
  %791 = vmatpush1.bf16.msra.mxu0 0
  %792 = vmatprep.subr.bf16.mxu0 0
  %793 = vmatpush1.bf16.msra.mxu0 0
  %794 = vmatprep.subr.bf16.mxu0 0
  %795 = vmatpush1.bf16.msra.mxu0 0
  %796 = vmatprep.subr.bf16.mxu0 0
  %797 = vmatpush1.bf16.msra.mxu0 0
  %798 = vmatprep.subr.bf16.mxu0 0
  %799 = vmatpush1.bf16.msra.mxu0 0
  %800 = vmatprep.subr.bf16.mxu0 0
  %801 = vmatpush1.bf16.msra.mxu0 %v738
  %802 = vmatprep.subr.bf16.mxu0 0
  %803 = vmatpush1.bf16.msra.mxu0 %v737
  %804 = vmatprep.subr.bf16.mxu0 0
  %805 = vmatpush2.bf16.msra.mxu0 0
  %806 = vmatprep.subr.bf16.mxu0 0
  %807 = vmatpush2.bf16.msra.mxu0 0
  %808 = vmatprep.subr.bf16.mxu0 0
  %809 = vmatpush2.bf16.msra.mxu0 0
  %810 = vmatprep.subr.bf16.mxu0 0
  %811 = vmatpush2.bf16.msra.mxu0 0
  %812 = vmatprep.subr.bf16.mxu0 0
  %813 = vmatpush2.bf16.msra.mxu0 0
  %814 = vmatprep.subr.bf16.mxu0 0
  %815 = vmatpush2.bf16.msra.mxu0 0
  %816 = vmatprep.subr.bf16.mxu0 0
  %817 = vmatpush2.bf16.msra.mxu0 0
  %818 = vmatprep.subr.bf16.mxu0 0
  %819 = vmatpush2.bf16.msra.mxu0 0
  %820 = vmatprep.mubr.bf16.mxu0 0
  %821 = vmatmul.mubr.bf16.gmra.mxu0 %v152
  %v822 = vpop.f32.mrf.mxu0
  %v823 = vadd.f32 0.0, %v822
  %v824 = vpop.f32.mrf.mxu0
  %v825 = vpop.f32.mrf.mxu0
  %v826 = vadd.f32 0.0, %v825
  %v827 = vpop.f32.mrf.mxu0
  %828 = vmatprep.mubr.bf16.mxu0 0
  %829 = vmatmul.mubr.bf16.gmra.mxu0 %v155
  %v830 = vpop.f32.mrf.mxu0
  %v831 = vadd.f32 0.0, %v830
  %v832 = vpop.f32.mrf.mxu0
  %v833 = vpop.f32.mrf.mxu0
  %v834 = vadd.f32 0.0, %v833
  %v835 = vpop.f32.mrf.mxu0
  %836 = vdwg.mxu0
  %v837 = vpack.c.bf16 %v777, %v774
  %v838 = vpack.c.bf16 %v785, %v782
  %839 = vmatprep.subr.bf16.mxu0 0
  %840 = vmatpush1.bf16.msra.mxu0 0
  %841 = vmatprep.subr.bf16.mxu0 0
  %842 = vmatpush1.bf16.msra.mxu0 0
  %843 = vmatprep.subr.bf16.mxu0 0
  %844 = vmatpush1.bf16.msra.mxu0 0
  %845 = vmatprep.subr.bf16.mxu0 0
  %846 = vmatpush1.bf16.msra.mxu0 0
  %847 = vmatprep.subr.bf16.mxu0 0
  %848 = vmatpush1.bf16.msra.mxu0 0
  %849 = vmatprep.subr.bf16.mxu0 0
  %850 = vmatpush1.bf16.msra.mxu0 0
  %851 = vmatprep.subr.bf16.mxu0 0
  %852 = vmatpush1.bf16.msra.mxu0 %v838
  %853 = vmatprep.subr.bf16.mxu0 0
  %854 = vmatpush1.bf16.msra.mxu0 %v837
  %855 = vmatprep.subr.bf16.mxu0 0
  %856 = vmatpush2.bf16.msra.mxu0 0
  %857 = vmatprep.subr.bf16.mxu0 0
  %858 = vmatpush2.bf16.msra.mxu0 0
  %859 = vmatprep.subr.bf16.mxu0 0
  %860 = vmatpush2.bf16.msra.mxu0 0
  %861 = vmatprep.subr.bf16.mxu0 0
  %862 = vmatpush2.bf16.msra.mxu0 0
  %863 = vmatprep.subr.bf16.mxu0 0
  %864 = vmatpush2.bf16.msra.mxu0 0
  %865 = vmatprep.subr.bf16.mxu0 0
  %866 = vmatpush2.bf16.msra.mxu0 0
  %867 = vmatprep.subr.bf16.mxu0 0
  %868 = vmatpush2.bf16.msra.mxu0 0
  %869 = vmatprep.subr.bf16.mxu0 0
  %870 = vmatpush2.bf16.msra.mxu0 0
  %871 = vmatprep.mubr.bf16.mxu0 0
  %872 = vmatmul.mubr.bf16.gmra.mxu0 %v87
  %v873 = vpop.f32.mrf.mxu0
  %v874 = vadd.f32 0.0, %v873
  %v875 = vpop.f32.mrf.mxu0
  %v876 = vpop.f32.mrf.mxu0
  %v877 = vadd.f32 0.0, %v876
  %v878 = vpop.f32.mrf.mxu0
  %879 = vmatprep.mubr.bf16.mxu0 0
  %880 = vmatmul.mubr.bf16.gmra.mxu0 %v90
  %v881 = vpop.f32.mrf.mxu0
  %v882 = vadd.f32 0.0, %v881
  %v883 = vpop.f32.mrf.mxu0
  %v884 = vpop.f32.mrf.mxu0
  %v885 = vadd.f32 0.0, %v884
  %v886 = vpop.f32.mrf.mxu0
  %887 = vdwg.mxu0
  %v888 = vmul.f32 %v874, 2.0
  %v889 = vmul.f32 %v877, 2.0
  %v890 = vmul.f32 %v882, 2.0
  %v891 = vmul.f32 %v885, 2.0
  %v892 = vsub.f32 %v888, %v733
  %v893 = vsub.f32 %v889, %v734
  %v894 = vsub.f32 %v890, %v735
  %v895 = vsub.f32 %v891, %v736
  %v896 = vpack.c.bf16 %v826, %v823
  %v897 = vpack.c.bf16 %v834, %v831
  %898 = vmatprep.subr.bf16.mxu0 0
  %899 = vmatpush1.bf16.msra.mxu0 0
  %900 = vmatprep.subr.bf16.mxu0 0
  %901 = vmatpush1.bf16.msra.mxu0 0
  %902 = vmatprep.subr.bf16.mxu0 0
  %903 = vmatpush1.bf16.msra.mxu0 0
  %904 = vmatprep.subr.bf16.mxu0 0
  %905 = vmatpush1.bf16.msra.mxu0 0
  %906 = vmatprep.subr.bf16.mxu0 0
  %907 = vmatpush1.bf16.msra.mxu0 0
  %908 = vmatprep.subr.bf16.mxu0 0
  %909 = vmatpush1.bf16.msra.mxu0 0
  %910 = vmatprep.subr.bf16.mxu0 0
  %911 = vmatpush1.bf16.msra.mxu0 %v897
  %912 = vmatprep.subr.bf16.mxu0 0
  %913 = vmatpush1.bf16.msra.mxu0 %v896
  %914 = vmatprep.subr.bf16.mxu0 0
  %915 = vmatpush2.bf16.msra.mxu0 0
  %916 = vmatprep.subr.bf16.mxu0 0
  %917 = vmatpush2.bf16.msra.mxu0 0
  %918 = vmatprep.subr.bf16.mxu0 0
  %919 = vmatpush2.bf16.msra.mxu0 0
  %920 = vmatprep.subr.bf16.mxu0 0
  %921 = vmatpush2.bf16.msra.mxu0 0
  %922 = vmatprep.subr.bf16.mxu0 0
  %923 = vmatpush2.bf16.msra.mxu0 0
  %924 = vmatprep.subr.bf16.mxu0 0
  %925 = vmatpush2.bf16.msra.mxu0 0
  %926 = vmatprep.subr.bf16.mxu0 0
  %927 = vmatpush2.bf16.msra.mxu0 0
  %928 = vmatprep.subr.bf16.mxu0 0
  %929 = vmatpush2.bf16.msra.mxu0 0
  %930 = vmatprep.mubr.bf16.mxu0 0
  %931 = vmatmul.mubr.bf16.gmra.mxu0 %v152
  %v932 = vpop.f32.mrf.mxu0
  %v933 = vadd.f32 0.0, %v932
  %v934 = vpop.f32.mrf.mxu0
  %v935 = vpop.f32.mrf.mxu0
  %v936 = vadd.f32 0.0, %v935
  %v937 = vpop.f32.mrf.mxu0
  %938 = vmatprep.mubr.bf16.mxu0 0
  %939 = vmatmul.mubr.bf16.gmra.mxu0 %v155
  %v940 = vpop.f32.mrf.mxu0
  %v941 = vadd.f32 0.0, %v940
  %v942 = vpop.f32.mrf.mxu0
  %v943 = vpop.f32.mrf.mxu0
  %v944 = vadd.f32 0.0, %v943
  %v945 = vpop.f32.mrf.mxu0
  %946 = vdwg.mxu0
  %v947 = vmul.f32 %v933, 2.0
  %v948 = vmul.f32 %v936, 2.0
  %v949 = vmul.f32 %v941, 2.0
  %v950 = vmul.f32 %v944, 2.0
  %v951 = vsub.f32 %v947, %v733
  %v952 = vsub.f32 %v948, %v734
  %v953 = vsub.f32 %v949, %v735
  %v954 = vsub.f32 %v950, %v736
  %959 = vrot.lane.b32.xlu0 %v733, 120
  %v960 = vpop.permute.xlu0 %959
  %961 = vrot.lane.b32.xlu0 %v734, 120
  %v962 = vpop.permute.xlu0 %961
  %963 = vrot.lane.b32.xlu0 %v735, 120
  %v964 = vpop.permute.xlu0 %963
  %965 = vrot.lane.b32.xlu0 %v736, 120
  %v966 = vpop.permute.xlu0 %965
  %v971 = vsub.f32 %v733, %v960
  %v972 = vsub.f32 %v734, %v962
  %v973 = vsub.f32 %v735, %v964
  %v974 = vsub.f32 %v736, %v966
  %979 = vrot.lane.b32.xlu0 %v823, 120
  %v980 = vpop.permute.xlu0 %979
  %981 = vrot.lane.b32.xlu0 %v826, 120
  %v982 = vpop.permute.xlu0 %981
  %983 = vrot.lane.b32.xlu0 %v831, 120
  %v984 = vpop.permute.xlu0 %983
  %985 = vrot.lane.b32.xlu0 %v834, 120
  %v986 = vpop.permute.xlu0 %985
  %v991 = vsub.f32 %v774, %v980
  %v992 = vsub.f32 %v777, %v982
  %v993 = vsub.f32 %v782, %v984
  %v994 = vsub.f32 %v785, %v986
  %999 = vrot.lane.b32.xlu0 %v951, 120
  %v1000 = vpop.permute.xlu0 %999
  %1001 = vrot.lane.b32.xlu0 %v952, 120
  %v1002 = vpop.permute.xlu0 %1001
  %1003 = vrot.lane.b32.xlu0 %v953, 120
  %v1004 = vpop.permute.xlu0 %1003
  %1005 = vrot.lane.b32.xlu0 %v954, 120
  %v1006 = vpop.permute.xlu0 %1005
  %v1011 = vsub.f32 %v892, %v1000
  %v1012 = vsub.f32 %v893, %v1002
  %v1013 = vsub.f32 %v894, %v1004
  %v1014 = vsub.f32 %v895, %v1006
  %1019 = vrot.lane.b32.xlu0 %v991, 8
  %v1020 = vpop.permute.xlu0 %1019
  %1021 = vrot.lane.b32.xlu0 %v992, 8
  %v1022 = vpop.permute.xlu0 %1021
  %1023 = vrot.lane.b32.xlu0 %v993, 8
  %v1024 = vpop.permute.xlu0 %1023
  %1025 = vrot.lane.b32.xlu0 %v994, 8
  %v1026 = vpop.permute.xlu0 %1025
  %1035 = vrot.lane.b32.xlu0 %v1011, 16
  %v1036 = vpop.permute.xlu0 %1035
  %1037 = vrot.lane.b32.xlu0 %v1012, 16
  %v1038 = vpop.permute.xlu0 %1037
  %1039 = vrot.lane.b32.xlu0 %v1013, 16
  %v1040 = vpop.permute.xlu0 %1039
  %1041 = vrot.lane.b32.xlu0 %v1014, 16
  %v1042 = vpop.permute.xlu0 %1041
  %v1047 = vsel %vm732, %v971, %v1020
  %v1048 = vsel %vm732, %v972, %v1022
  %v1049 = vsel %vm732, %v973, %v1024
  %v1050 = vsel %vm732, %v974, %v1026
  %v1051 = vsel %vm68, %v1047, %v1036
  %v1052 = vsel %vm68, %v1048, %v1038
  %v1053 = vsel %vm68, %v1049, %v1040
  %v1054 = vsel %vm68, %v1050, %v1042
  %v1055 = vadd.f32 %v733, %v960
  %v1056 = vadd.f32 %v734, %v962
  %v1057 = vadd.f32 %v735, %v964
  %v1058 = vadd.f32 %v736, %v966
  %1063 = vrot.lane.b32.xlu0 %v774, 120
  %v1064 = vpop.permute.xlu0 %1063
  %1065 = vrot.lane.b32.xlu0 %v777, 120
  %v1066 = vpop.permute.xlu0 %1065
  %1067 = vrot.lane.b32.xlu0 %v782, 120
  %v1068 = vpop.permute.xlu0 %1067
  %1069 = vrot.lane.b32.xlu0 %v785, 120
  %v1070 = vpop.permute.xlu0 %1069
  %v1075 = vadd.f32 %v823, %v1064
  %v1076 = vadd.f32 %v826, %v1066
  %v1077 = vadd.f32 %v831, %v1068
  %v1078 = vadd.f32 %v834, %v1070
  %1083 = vrot.lane.b32.xlu0 %v892, 120
  %v1084 = vpop.permute.xlu0 %1083
  %1085 = vrot.lane.b32.xlu0 %v893, 120
  %v1086 = vpop.permute.xlu0 %1085
  %1087 = vrot.lane.b32.xlu0 %v894, 120
  %v1088 = vpop.permute.xlu0 %1087
  %1089 = vrot.lane.b32.xlu0 %v895, 120
  %v1090 = vpop.permute.xlu0 %1089
  %v1095 = vadd.f32 %v951, %v1084
  %v1096 = vadd.f32 %v952, %v1086
  %v1097 = vadd.f32 %v953, %v1088
  %v1098 = vadd.f32 %v954, %v1090
  %1103 = vrot.lane.b32.xlu0 %v1075, 8
  %v1104 = vpop.permute.xlu0 %1103
  %1105 = vrot.lane.b32.xlu0 %v1076, 8
  %v1106 = vpop.permute.xlu0 %1105
  %1107 = vrot.lane.b32.xlu0 %v1077, 8
  %v1108 = vpop.permute.xlu0 %1107
  %1109 = vrot.lane.b32.xlu0 %v1078, 8
  %v1110 = vpop.permute.xlu0 %1109
  %1119 = vrot.lane.b32.xlu0 %v1095, 16
  %v1120 = vpop.permute.xlu0 %1119
  %1121 = vrot.lane.b32.xlu0 %v1096, 16
  %v1122 = vpop.permute.xlu0 %1121
  %1123 = vrot.lane.b32.xlu0 %v1097, 16
  %v1124 = vpop.permute.xlu0 %1123
  %1125 = vrot.lane.b32.xlu0 %v1098, 16
  %v1126 = vpop.permute.xlu0 %1125
  %v1131 = vsel %vm732, %v1055, %v1104
  %v1132 = vsel %vm732, %v1056, %v1106
  %v1133 = vsel %vm732, %v1057, %v1108
  %v1134 = vsel %vm732, %v1058, %v1110
  %v1135 = vsel %vm68, %v1131, %v1120
  %v1136 = vsel %vm68, %v1132, %v1122
  %v1137 = vsel %vm68, %v1133, %v1124
  %v1138 = vsel %vm68, %v1134, %v1126
  %v1139 = vld [vmem:[%s6] sm:$0xff]
  %v1140 = vld [vmem:[%s6 + $0x8] sm:$0xff]
  %v1141 = vld [vmem:[%s6 + $0x10] sm:$0xff]
  %v1142 = vld [vmem:[%s7] sm:$0x1]
  %v1144 = vlaneseq
  %v1145 = vshrl.u32 %v1144, 7
  %v1146 = vsub.s32 0, %v1145
  %v1147 = vrot.slane %v1142, %v1146
  %vm1149 = vcmask 195584
  %v1151 = vsel %vm1149, %v1051, 0
  %v1154 = vsel %vm1149, %v1052, 0
  %v1157 = vsel %vm1149, %v1053, 0
  %v1160 = vsel %vm1149, %v1054, 0
  %1162 = vmatprep.subr.mxu0 0.0
  %1163 = vmatpush1.msra.mxu0 0.0
  %1164 = vmatprep.subr.mxu0 0.0
  %1165 = vmatpush1.msra.mxu0 0.0
  %1166 = vmatprep.subr.mxu0 0.0
  %1167 = vmatpush1.msra.mxu0 0.0
  %1168 = vmatprep.subr.mxu0 0.0
  %1169 = vmatpush1.msra.mxu0 0.0
  %1170 = vmatprep.subr.mxu0 0.0
  %1171 = vmatpush1.msra.mxu0 0.0
  %1172 = vmatprep.subr.mxu0 0.0
  %1173 = vmatpush1.msra.mxu0 0.0
  %1174 = vmatprep.subr.mxu0 0.0
  %1175 = vmatpush1.msra.mxu0 0.0
  %1176 = vmatprep.subr.mxu0 0.0
  %1177 = vmatpush1.msra.mxu0 0.0
  %1178 = vmatprep.subr.mxu0 0.0
  %1179 = vmatpush1.msra.mxu0 0.0
  %1180 = vmatprep.subr.mxu0 0.0
  %1181 = vmatpush1.msra.mxu0 0.0
  %1182 = vmatprep.subr.mxu0 0.0
  %1183 = vmatpush1.msra.mxu0 0.0
  %1184 = vmatprep.subr.mxu0 0.0
  %1185 = vmatpush1.msra.mxu0 0.0
  %1186 = vmatprep.subr.mxu0 0.0
  %1187 = vmatpush1.msra.mxu0 0.0
  %1188 = vmatprep.subr.mxu0 0.0
  %1189 = vmatpush1.msra.mxu0 %v1141
  %1190 = vmatprep.subr.mxu0 0.0
  %1191 = vmatpush1.msra.mxu0 %v1140
  %1192 = vmatprep.subr.mxu0 0.0
  %1193 = vmatpush1.msra.mxu0 %v1139
  %1194 = vmatprep.subr.mxu0 0.0
  %1195 = vmatpush2.msra.mxu0 0.0
  %1196 = vmatprep.subr.mxu0 0.0
  %1197 = vmatpush2.msra.mxu0 0.0
  %1198 = vmatprep.subr.mxu0 0.0
  %1199 = vmatpush2.msra.mxu0 0.0
  %1200 = vmatprep.subr.mxu0 0.0
  %1201 = vmatpush2.msra.mxu0 0.0
  %1202 = vmatprep.subr.mxu0 0.0
  %1203 = vmatpush2.msra.mxu0 0.0
  %1204 = vmatprep.subr.mxu0 0.0
  %1205 = vmatpush2.msra.mxu0 0.0
  %1206 = vmatprep.subr.mxu0 0.0
  %1207 = vmatpush2.msra.mxu0 0.0
  %1208 = vmatprep.subr.mxu0 0.0
  %1209 = vmatpush2.msra.mxu0 0.0
  %1210 = vmatprep.subr.mxu0 0.0
  %1211 = vmatpush2.msra.mxu0 0.0
  %1212 = vmatprep.subr.mxu0 0.0
  %1213 = vmatpush2.msra.mxu0 0.0
  %1214 = vmatprep.subr.mxu0 0.0
  %1215 = vmatpush2.msra.mxu0 0.0
  %1216 = vmatprep.subr.mxu0 0.0
  %1217 = vmatpush2.msra.mxu0 0.0
  %1218 = vmatprep.subr.mxu0 0.0
  %1219 = vmatpush2.msra.mxu0 0.0
  %1220 = vmatprep.subr.mxu0 0.0
  %1221 = vmatpush2.msra.mxu0 0.0
  %1222 = vmatprep.subr.mxu0 0.0
  %1223 = vmatpush2.msra.mxu0 0.0
  %1224 = vmatprep.subr.mxu0 0.0
  %1225 = vmatpush2.msra.mxu0 0.0
  %1226 = vmatprep.mubr.f32.mxu0 0.0
  %1227 = vmatmul.mubr.f32.gmra.mxu0 %v1151
  %v1228 = vpop.f32.mrf.mxu0
  %v1229 = vadd.f32 %v1147, %v1228
  %v1230 = vpop.f32.mrf.mxu0
  %1231 = vmatprep.mubr.f32.mxu0 0.0
  %1232 = vmatmul.mubr.f32.gmra.mxu0 %v1154
  %v1233 = vpop.f32.mrf.mxu0
  %v1234 = vadd.f32 %v1147, %v1233
  %v1235 = vpop.f32.mrf.mxu0
  %1236 = vmatprep.mubr.f32.mxu0 0.0
  %1237 = vmatmul.mubr.f32.gmra.mxu0 %v1157
  %v1238 = vpop.f32.mrf.mxu0
  %v1239 = vadd.f32 %v1147, %v1238
  %v1240 = vpop.f32.mrf.mxu0
  %1241 = vmatprep.mubr.f32.mxu0 0.0
  %1242 = vmatmul.mubr.f32.gmra.mxu0 %v1160
  %v1243 = vpop.f32.mrf.mxu0
  %v1244 = vadd.f32 %v1147, %v1243
  %v1245 = vpop.f32.mrf.mxu0
  %1246 = vdwg.mxu0
  %v1248 = vsel %vm1149, %v1135, 0
  %v1251 = vsel %vm1149, %v1136, 0
  %v1254 = vsel %vm1149, %v1137, 0
  %v1257 = vsel %vm1149, %v1138, 0
  %1259 = vmatprep.subr.mxu0 0.0
  %1260 = vmatpush1.msra.mxu0 0.0
  %1261 = vmatprep.subr.mxu0 0.0
  %1262 = vmatpush1.msra.mxu0 0.0
  %1263 = vmatprep.subr.mxu0 0.0
  %1264 = vmatpush1.msra.mxu0 0.0
  %1265 = vmatprep.subr.mxu0 0.0
  %1266 = vmatpush1.msra.mxu0 0.0
  %1267 = vmatprep.subr.mxu0 0.0
  %1268 = vmatpush1.msra.mxu0 0.0
  %1269 = vmatprep.subr.mxu0 0.0
  %1270 = vmatpush1.msra.mxu0 0.0
  %1271 = vmatprep.subr.mxu0 0.0
  %1272 = vmatpush1.msra.mxu0 0.0
  %1273 = vmatprep.subr.mxu0 0.0
  %1274 = vmatpush1.msra.mxu0 0.0
  %1275 = vmatprep.subr.mxu0 0.0
  %1276 = vmatpush1.msra.mxu0 0.0
  %1277 = vmatprep.subr.mxu0 0.0
  %1278 = vmatpush1.msra.mxu0 0.0
  %1279 = vmatprep.subr.mxu0 0.0
  %1280 = vmatpush1.msra.mxu0 0.0
  %1281 = vmatprep.subr.mxu0 0.0
  %1282 = vmatpush1.msra.mxu0 0.0
  %1283 = vmatprep.subr.mxu0 0.0
  %1284 = vmatpush1.msra.mxu0 0.0
  %1285 = vmatprep.subr.mxu0 0.0
  %1286 = vmatpush1.msra.mxu0 %v1141
  %1287 = vmatprep.subr.mxu0 0.0
  %1288 = vmatpush1.msra.mxu0 %v1140
  %1289 = vmatprep.subr.mxu0 0.0
  %1290 = vmatpush1.msra.mxu0 %v1139
  %1291 = vmatprep.subr.mxu0 0.0
  %1292 = vmatpush2.msra.mxu0 0.0
  %1293 = vmatprep.subr.mxu0 0.0
  %1294 = vmatpush2.msra.mxu0 0.0
  %1295 = vmatprep.subr.mxu0 0.0
  %1296 = vmatpush2.msra.mxu0 0.0
  %1297 = vmatprep.subr.mxu0 0.0
  %1298 = vmatpush2.msra.mxu0 0.0
  %1299 = vmatprep.subr.mxu0 0.0
  %1300 = vmatpush2.msra.mxu0 0.0
  %1301 = vmatprep.subr.mxu0 0.0
  %1302 = vmatpush2.msra.mxu0 0.0
  %1303 = vmatprep.subr.mxu0 0.0
  %1304 = vmatpush2.msra.mxu0 0.0
  %1305 = vmatprep.subr.mxu0 0.0
  %1306 = vmatpush2.msra.mxu0 0.0
  %1307 = vmatprep.subr.mxu0 0.0
  %1308 = vmatpush2.msra.mxu0 0.0
  %1309 = vmatprep.subr.mxu0 0.0
  %1310 = vmatpush2.msra.mxu0 0.0
  %1311 = vmatprep.subr.mxu0 0.0
  %1312 = vmatpush2.msra.mxu0 0.0
  %1313 = vmatprep.subr.mxu0 0.0
  %1314 = vmatpush2.msra.mxu0 0.0
  %1315 = vmatprep.subr.mxu0 0.0
  %1316 = vmatpush2.msra.mxu0 0.0
  %1317 = vmatprep.subr.mxu0 0.0
  %1318 = vmatpush2.msra.mxu0 0.0
  %1319 = vmatprep.subr.mxu0 0.0
  %1320 = vmatpush2.msra.mxu0 0.0
  %1321 = vmatprep.subr.mxu0 0.0
  %1322 = vmatpush2.msra.mxu0 0.0
  %1323 = vmatprep.mubr.f32.mxu0 0.0
  %1324 = vmatmul.mubr.f32.gmra.mxu0 %v1248
  %v1325 = vpop.f32.mrf.mxu0
  %v1326 = vadd.f32 %v1147, %v1325
  %v1327 = vpop.f32.mrf.mxu0
  %1328 = vmatprep.mubr.f32.mxu0 0.0
  %1329 = vmatmul.mubr.f32.gmra.mxu0 %v1251
  %v1330 = vpop.f32.mrf.mxu0
  %v1331 = vadd.f32 %v1147, %v1330
  %v1332 = vpop.f32.mrf.mxu0
  %1333 = vmatprep.mubr.f32.mxu0 0.0
  %1334 = vmatmul.mubr.f32.gmra.mxu0 %v1254
  %v1335 = vpop.f32.mrf.mxu0
  %v1336 = vadd.f32 %v1147, %v1335
  %v1337 = vpop.f32.mrf.mxu0
  %1338 = vmatprep.mubr.f32.mxu0 0.0
  %1339 = vmatmul.mubr.f32.gmra.mxu0 %v1257
  %v1340 = vpop.f32.mrf.mxu0
  %v1341 = vadd.f32 %v1147, %v1340
  %v1342 = vpop.f32.mrf.mxu0
  %1343 = vdwg.mxu0
  %1348 = vrot.lane.b32.xlu0 %v1326, 8
  %v1349 = vpop.permute.xlu0 %1348
  %1350 = vrot.lane.b32.xlu0 %v1331, 8
  %v1351 = vpop.permute.xlu0 %1350
  %1352 = vrot.lane.b32.xlu0 %v1336, 8
  %v1353 = vpop.permute.xlu0 %1352
  %1354 = vrot.lane.b32.xlu0 %v1341, 8
  %v1355 = vpop.permute.xlu0 %1354
  %v1360 = vsel %vm732, %v1229, %v1349
  %v1361 = vsel %vm732, %v1234, %v1351
  %v1362 = vsel %vm732, %v1239, %v1353
  %v1363 = vsel %vm732, %v1244, %v1355
  %v1364 = vld [vmem:[%s8] sm:$0xff]
  %v1365 = vld [vmem:[%s8 + $0x8] sm:$0xff]
  %v1366 = vld [vmem:[%s9] sm:$0x1]
  %v1368 = vlaneseq
  %v1369 = vshrl.u32 %v1368, 7
  %v1370 = vsub.s32 0, %v1369
  %v1371 = vrot.slane %v1366, %v1370
  %v1374 = vsel %vm68, %v1360, 0
  %v1377 = vsel %vm68, %v1361, 0
  %v1380 = vsel %vm68, %v1362, 0
  %v1383 = vsel %vm68, %v1363, 0
  %1385 = vmatprep.subr.mxu0 0.0
  %1386 = vmatpush1.msra.mxu0 0.0
  %1387 = vmatprep.subr.mxu0 0.0
  %1388 = vmatpush1.msra.mxu0 0.0
  %1389 = vmatprep.subr.mxu0 0.0
  %1390 = vmatpush1.msra.mxu0 0.0
  %1391 = vmatprep.subr.mxu0 0.0
  %1392 = vmatpush1.msra.mxu0 0.0
  %1393 = vmatprep.subr.mxu0 0.0
  %1394 = vmatpush1.msra.mxu0 0.0
  %1395 = vmatprep.subr.mxu0 0.0
  %1396 = vmatpush1.msra.mxu0 0.0
  %1397 = vmatprep.subr.mxu0 0.0
  %1398 = vmatpush1.msra.mxu0 0.0
  %1399 = vmatprep.subr.mxu0 0.0
  %1400 = vmatpush1.msra.mxu0 0.0
  %1401 = vmatprep.subr.mxu0 0.0
  %1402 = vmatpush1.msra.mxu0 0.0
  %1403 = vmatprep.subr.mxu0 0.0
  %1404 = vmatpush1.msra.mxu0 0.0
  %1405 = vmatprep.subr.mxu0 0.0
  %1406 = vmatpush1.msra.mxu0 0.0
  %1407 = vmatprep.subr.mxu0 0.0
  %1408 = vmatpush1.msra.mxu0 0.0
  %1409 = vmatprep.subr.mxu0 0.0
  %1410 = vmatpush1.msra.mxu0 0.0
  %1411 = vmatprep.subr.mxu0 0.0
  %1412 = vmatpush1.msra.mxu0 0.0
  %1413 = vmatprep.subr.mxu0 0.0
  %1414 = vmatpush1.msra.mxu0 %v1365
  %1415 = vmatprep.subr.mxu0 0.0
  %1416 = vmatpush1.msra.mxu0 %v1364
  %1417 = vmatprep.subr.mxu0 0.0
  %1418 = vmatpush2.msra.mxu0 0.0
  %1419 = vmatprep.subr.mxu0 0.0
  %1420 = vmatpush2.msra.mxu0 0.0
  %1421 = vmatprep.subr.mxu0 0.0
  %1422 = vmatpush2.msra.mxu0 0.0
  %1423 = vmatprep.subr.mxu0 0.0
  %1424 = vmatpush2.msra.mxu0 0.0
  %1425 = vmatprep.subr.mxu0 0.0
  %1426 = vmatpush2.msra.mxu0 0.0
  %1427 = vmatprep.subr.mxu0 0.0
  %1428 = vmatpush2.msra.mxu0 0.0
  %1429 = vmatprep.subr.mxu0 0.0
  %1430 = vmatpush2.msra.mxu0 0.0
  %1431 = vmatprep.subr.mxu0 0.0
  %1432 = vmatpush2.msra.mxu0 0.0
  %1433 = vmatprep.subr.mxu0 0.0
  %1434 = vmatpush2.msra.mxu0 0.0
  %1435 = vmatprep.subr.mxu0 0.0
  %1436 = vmatpush2.msra.mxu0 0.0
  %1437 = vmatprep.subr.mxu0 0.0
  %1438 = vmatpush2.msra.mxu0 0.0
  %1439 = vmatprep.subr.mxu0 0.0
  %1440 = vmatpush2.msra.mxu0 0.0
  %1441 = vmatprep.subr.mxu0 0.0
  %1442 = vmatpush2.msra.mxu0 0.0
  %1443 = vmatprep.subr.mxu0 0.0
  %1444 = vmatpush2.msra.mxu0 0.0
  %1445 = vmatprep.subr.mxu0 0.0
  %1446 = vmatpush2.msra.mxu0 0.0
  %1447 = vmatprep.subr.mxu0 0.0
  %1448 = vmatpush2.msra.mxu0 0.0
  %1449 = vmatprep.mubr.f32.mxu0 0.0
  %1450 = vmatmul.mubr.f32.gmra.mxu0 %v1374
  %v1451 = vpop.f32.mrf.mxu0
  %v1452 = vadd.f32 %v1371, %v1451
  %v1453 = vpop.f32.mrf.mxu0
  %1454 = vmatprep.mubr.f32.mxu0 0.0
  %1455 = vmatmul.mubr.f32.gmra.mxu0 %v1377
  %v1456 = vpop.f32.mrf.mxu0
  %v1457 = vadd.f32 %v1371, %v1456
  %v1458 = vpop.f32.mrf.mxu0
  %1459 = vmatprep.mubr.f32.mxu0 0.0
  %1460 = vmatmul.mubr.f32.gmra.mxu0 %v1380
  %v1461 = vpop.f32.mrf.mxu0
  %v1462 = vadd.f32 %v1371, %v1461
  %v1463 = vpop.f32.mrf.mxu0
  %1464 = vmatprep.mubr.f32.mxu0 0.0
  %1465 = vmatmul.mubr.f32.gmra.mxu0 %v1383
  %v1466 = vpop.f32.mrf.mxu0
  %v1467 = vadd.f32 %v1371, %v1466
  %v1468 = vpop.f32.mrf.mxu0
  %1469 = vdwg.mxu0
  %vm1470 = vcmask 31744
  %v1471 = vsel %vm1470, %v1452, -inf
  %1472 = vmax.xlane.f32.xlu0 %v1471
  %v1473 = vpop.xlane.xlu0 %1472
  %v1474 = vsel %vm1470, %v1457, -inf
  %1475 = vmax.xlane.f32.xlu0 %v1474
  %v1476 = vpop.xlane.xlu0 %1475
  %v1477 = vsel %vm1470, %v1462, -inf
  %1478 = vmax.xlane.f32.xlu0 %v1477
  %v1479 = vpop.xlane.xlu0 %1478
  %v1480 = vsel %vm1470, %v1467, -inf
  %1481 = vmax.xlane.f32.xlu0 %v1480
  %v1482 = vpop.xlane.xlu0 %1481
  %v1483 = vsub.f32 %v1452, %v1473
  %v1484 = vsub.f32 %v1457, %v1476
  %v1485 = vsub.f32 %v1462, %v1479
  %v1486 = vsub.f32 %v1467, %v1482
  %v1487 = vmul.f32 %v1483, 1.442695
  %v1488 = vpow.pop %v1487
  %v1489 = vmul.f32 %v1484, 1.442695
  %v1490 = vpow.pop %v1489
  %v1491 = vmul.f32 %v1485, 1.442695
  %v1492 = vpow.pop %v1491
  %v1493 = vmul.f32 %v1486, 1.442695
  %v1494 = vpow.pop %v1493
  %v1495 = vsel %vm1470, %v1488, 0.0
  %1496 = vadd.xlane.f32.xlu0 %v1495
  %v1497 = vpop.xlane.xlu0 %1496
  %v1498 = vsel %vm1470, %v1490, 0.0
  %1499 = vadd.xlane.f32.xlu0 %v1498
  %v1500 = vpop.xlane.xlu0 %1499
  %v1501 = vsel %vm1470, %v1492, 0.0
  %1502 = vadd.xlane.f32.xlu0 %v1501
  %v1503 = vpop.xlane.xlu0 %1502
  %v1504 = vsel %vm1470, %v1494, 0.0
  %1505 = vadd.xlane.f32.xlu0 %v1504
  %v1506 = vpop.xlane.xlu0 %1505
  %v1507 = vlog2.pop %v1497
  %v1508 = vmul.f32 %v1507, 0.6931472
  %v1509 = vlog2.pop %v1500
  %v1510 = vmul.f32 %v1509, 0.6931472
  %v1511 = vlog2.pop %v1503
  %v1512 = vmul.f32 %v1511, 0.6931472
  %v1513 = vlog2.pop %v1506
  %v1514 = vmul.f32 %v1513, 0.6931472
  %v1515 = vsub.f32 %v1483, %v1508
  %v1516 = vsub.f32 %v1484, %v1510
  %v1517 = vsub.f32 %v1485, %v1512
  %v1518 = vsub.f32 %v1486, %v1514
  %1519 = vst.msk [vmem:[%s10] sm:$0xff] %vm1470, %v1515
  %1520 = vst.msk [vmem:[%s10 + $0x8] sm:$0xff] %vm1470, %v1516
  %1521 = vst.msk [vmem:[%s10 + $0x10] sm:$0xff] %vm1470, %v1517
  %1522 = vst.msk [vmem:[%s10 + $0x18] sm:$0xff] %vm1470, %v1518
  // Predicated region
  $region42: #{tpu_custom_call.1} parent=0 // pred_check
    _
  $region43: #{tpu_custom_call.1} parent=0 // pred_check_branch
    %1524 = sbr.rel (0) target = $region45
  $region44: #{tpu_custom_call.1} parent=0 // pred_region
    _
  $region45: #{tpu_custom_call.1} parent=0 // pred_fallthru
    _
  // Predicated region
  $region46: #{tpu_custom_call.1} parent=0 // pred_check
    _
  $region47: #{tpu_custom_call.1} parent=0 // pred_check_branch
    %1526 = sbr.rel (0) target = $region49
  $region48: #{tpu_custom_call.1} parent=0 // pred_region
    _
  $region49: #{tpu_custom_call.1} parent=0 // pred_fallthru
    _

</llo_original>
